<compile_context>
chip_gen: v7x
topology: tpu7x:2x2x1
jax: 0.10.0
libtpu: 0.0.40
codegen_flags: <defaults>
</compile_context>

<pallas_src>
import functools
import math

import jax
import jax.numpy as jnp
from jax.experimental import pallas as pl
from jax.experimental.pallas import tpu as pltpu

EPS = 1e-5
_TB_MAX = 4096   # max batch-tile lanes; ~5-6 MiB VMEM at this size (fits v5e/v6e/v7x scoped limits)


def convnet_kernel(x_ref, w_ref, bn_ref, g_ref, gt_ref, fw_ref, fb_ref, o_ref,
                   s1_ref, s2_ref, *, b_real, b_pad):
    """One (phase, batch-tile) grid step.  TB = batch lanes of this tile.

    Ref shapes (batch is ALWAYS the last / lane axis):
      x_ref : (Cin*L,      TB)    mxu dtype  raw input slab (no im2col)
      w_ref : (Cout*Lout, Cin*L)  mxu dtype  Toeplitz conv weight (conv + flatten = 1 matmul)
      bn_ref: (Cout, 2)           f32        [gamma, beta]
      g_ref : (Cout*Lout, Cout)   f32        0/1 row <- channel broadcast matrix
      gt_ref: (Cout, Cout*Lout)   f32        0/1 channel <- row reduce matrix
      fw_ref: (OUT, Cout*Lout)    mxu dtype  FC weight (channel-major flatten, as torch)
      fb_ref: (OUT, 1)            f32
      o_ref : (OUT, TB)           f32
      s1/s2 : (Cout*Lout, 1)      f32 scratch: per-row sum / sumsq (phase 0),
                                               per-row BN scale / shift (after finalize)
    """
    phase = pl.program_id(0)
    bidx = pl.program_id(1)
    nb = pl.num_programs(1)

    F = w_ref.shape[0]            # Cout * Lout (= 64)
    cout = bn_ref.shape[0]
    lout = F // cout
    TB = x_ref.shape[1]

    # Conv1d (valid, stride 1) + channel-major flatten: ONE MXU contraction of depth Cin*L.
    # (Conv bias omitted: it cancels exactly under training-mode BatchNorm.)
    u = jnp.dot(w_ref[...], x_ref[...], preferred_element_type=jnp.float32)   # (F, TB) f32

    @pl.when(phase == 0)
    def _accumulate_stats():
        @pl.when(bidx == 0)
        def _init():
            s1_ref[...] = jnp.zeros_like(s1_ref)
            s2_ref[...] = jnp.zeros_like(s2_ref)

        if b_pad != b_real:       # static: mask padded batch lanes out of the statistics
            lane = jax.lax.broadcasted_iota(jnp.int32, (1, TB), 1) + bidx * TB
            um = jnp.where(lane < b_real, u, 0.0)
        else:
            um = u
        s1_ref[...] += jnp.sum(um, axis=1, keepdims=True)        # per-row sum
        s2_ref[...] += jnp.sum(um * u, axis=1, keepdims=True)    # per-row sum of squares

        @pl.when(bidx == nb - 1)
        def _finalize():
            # Per-channel stats over (batch, Lout); biased variance, eps=1e-5 (PyTorch BN).
            n = jnp.float32(b_real * lout)
            c_sum = jnp.dot(gt_ref[...], s1_ref[...], preferred_element_type=jnp.float32)
            c_ssq = jnp.dot(gt_ref[...], s2_ref[...], preferred_element_type=jnp.float32)
            mean = c_sum / n
            # TODO(synk): at very large B*Lout switch to a dedicated mean phase (3-phase
            # grid) to avoid E[u^2]-E[u]^2 cancellation; f32 is ample at these magnitudes.
            var = jnp.maximum(c_ssq / n - mean * mean, 0.0)
            bn = bn_ref[...]
            scale_c = bn[:, 0:1] * jax.lax.rsqrt(var + EPS)      # gamma * rsqrt   (EUP)
            shift_c = bn[:, 1:2] - mean * scale_c                # beta - mean * scale
            # Broadcast channel -> rows once, so phase 1 is a plain lane-broadcast FMA.
            s1_ref[...] = jnp.dot(g_ref[...], scale_c, preferred_element_type=jnp.float32)
            s2_ref[...] = jnp.dot(g_ref[...], shift_c, preferred_element_type=jnp.float32)

        # Output blocks are revisited in phase 1; keep the phase-0 write-back defined.
        o_ref[...] = jnp.zeros_like(o_ref)

    @pl.when(phase == 1)
    def _normalize_relu_fc():
        y = jnp.maximum(u * s1_ref[...] + s2_ref[...], 0.0)      # BN affine + ReLU, f32
        o_ref[...] = jnp.dot(fw_ref[...], y.astype(fw_ref.dtype),
                             preferred_element_type=jnp.float32) + fb_ref[...]


def _toeplitz_conv_weight(cw, lout):
    """(Cout, Cin, K) -> (Cout*Lout, Cin*L) so that W_big @ x_slab == conv1d + flatten."""
    cout, cin, k = cw.shape
    rows = []
    for o in range(cout):
        per_c = [jnp.stack([jnp.pad(cw[o, c], (t, lout - 1 - t)) for t in range(lout)])
                 for c in range(cin)]                       # each (Lout, L)
        rows.append(jnp.concatenate(per_c, axis=1))         # (Lout, Cin*L)
    return jnp.concatenate(rows, axis=0)                    # (Cout*Lout, Cin*L)


def convnet_forward(x, params, *, mxu_dtype=jnp.bfloat16, batch_tile=None):
    cw = params["conv_w"]                 # (Cout, Cin, K); conv_b cancels under training BN
    gamma, beta = params["bn_gamma"], params["bn_beta"]
    fcw, fcb = params["fc_w"], params["fc_b"]

    B, Cin, L = x.shape
    Cout, _, K = cw.shape
    Lout = L - K + 1
    F = Cout * Lout
    OUT = fcw.shape[0]
    assert fcw.shape[1] == F, "fc expects Cout*Lout flattened features"

    # ----- batch tiling (lane axis) -----
    TB = batch_tile if batch_tile is not None else min(B, _TB_MAX)
    if TB >= B:
        TB, nb, B_pad = B, 1, B
    else:
        assert TB % 128 == 0, "batch_tile must be a multiple of 128 when it does not cover B"
        nb = -(-B // TB)
        B_pad = nb * TB

    # ----- wrapper-side constant plumbing (weights only; activations are NOT expanded) -----
    x2 = jnp.transpose(x, (1, 2, 0)).reshape(Cin * L, B)            # batch -> lane axis
    if B_pad != B:
        x2 = jnp.pad(x2, ((0, 0), (0, B_pad - B)))
    w_big = _toeplitz_conv_weight(cw, Lout)                          # (F, Cin*L)
    bn_pack = jnp.stack([gamma, beta], axis=1).astype(jnp.float32)   # (Cout, 2)
    rows = jnp.arange(F) // Lout
    g = (rows[:, None] == jnp.arange(Cout)[None, :]).astype(jnp.float32)   # (F, Cout)
    gt = g.T                                                         # (Cout, F)
    fb2 = fcb.reshape(OUT, 1).astype(jnp.float32)

    itemsize = jnp.finfo(mxu_dtype).bits // 8
    cost = pl.CostEstimate(
        flops=2 * B_pad * (2 * F * Cin * L + OUT * F),               # conv runs in both phases
        transcendentals=Cout,
        bytes_accessed=(2 * Cin * L * B_pad * itemsize + OUT * B_pad * 4
                        + (F * Cin * L + OUT * F) * itemsize))

    kernel = functools.partial(convnet_kernel, b_real=B, b_pad=B_pad)
    out_pad = pl.pallas_call(
        kernel,
        out_shape=jax.ShapeDtypeStruct((OUT, B_pad), jnp.float32),
        grid=(2, nb),                                    # (phase, batch tile)
        in_specs=[
            pl.BlockSpec((Cin * L, TB), lambda p, b: (0, b)),   # streamed per batch tile
            pl.BlockSpec((F, Cin * L), lambda p, b: (0, 0)),    # constant blocks: DMA'd once
            pl.BlockSpec((Cout, 2), lambda p, b: (0, 0)),
            pl.BlockSpec((F, Cout), lambda p, b: (0, 0)),
            pl.BlockSpec((Cout, F), lambda p, b: (0, 0)),
            pl.BlockSpec((OUT, F), lambda p, b: (0, 0)),
            pl.BlockSpec((OUT, 1), lambda p, b: (0, 0)),
        ],
        out_specs=pl.BlockSpec((OUT, TB), lambda p, b: (0, b)),
        scratch_shapes=[pltpu.VMEM((F, 1), jnp.float32),
                        pltpu.VMEM((F, 1), jnp.float32)],
        compiler_params=pltpu.CompilerParams(
            # Batch axis carries the BN-statistics accumulation -> must stay "arbitrary".
            dimension_semantics=("arbitrary", "arbitrary"),
            # ~5-6 MiB used at TB=4096; 32 MiB is safe on v5e (128 MiB phys) and within
            # v7x's 64 MiB physical / 32 MiB default-scoped VMEM.
            vmem_limit_bytes=32 * 1024 * 1024),
        cost_estimate=cost,
    )(x2.astype(mxu_dtype), w_big.astype(mxu_dtype), bn_pack, g, gt,
      fcw.astype(mxu_dtype), fb2)
    return out_pad[:, :B].T                                          # (B, OUT) f32


def init_params(key, in_channel, out_channel, cout=4, k=7, feat=64):
    """Parameters with the PyTorch module's shapes (synthetic deterministic values)."""
    k1, k2, k3, k4, k5, k6 = jax.random.split(key, 6)
    bc = 1.0 / math.sqrt(in_channel * k)
    bf = 1.0 / math.sqrt(feat)
    return {
        "conv_w": jax.random.uniform(k1, (cout, in_channel, k), jnp.float32, -bc, bc),
        "conv_b": jax.random.uniform(k2, (cout,), jnp.float32, -bc, bc),
        # non-default BN affine so the scale/shift path is actually exercised
        "bn_gamma": jax.random.uniform(k5, (cout,), jnp.float32, 0.5, 1.5),
        "bn_beta": jax.random.uniform(k6, (cout,), jnp.float32, -0.5, 0.5),
        "fc_w": jax.random.uniform(k3, (out_channel, feat), jnp.float32, -bf, bf),
        "fc_b": jax.random.uniform(k4, (out_channel,), jnp.float32, -bf, bf),
    }


def convnet_ref(x, params):
    """Pure-JAX reference of the PyTorch forward (training-mode BN, biased variance)."""
    cw, cb = params["conv_w"], params["conv_b"]
    B, Cin, L = x.shape
    Cout, _, K = cw.shape
    Lout = L - K + 1
    y = jnp.zeros((B, Cout, Lout), jnp.float32)
    for k in range(K):
        y = y + jnp.einsum('bct,oc->bot', x[:, :, k:k + Lout], cw[:, :, k])
    y = y + cb[None, :, None]
    mean = jnp.mean(y, axis=(0, 2), keepdims=True)
    var = jnp.mean((y - mean) ** 2, axis=(0, 2), keepdims=True)
    y = (y - mean) / jnp.sqrt(var + EPS)
    y = y * params["bn_gamma"][None, :, None] + params["bn_beta"][None, :, None]
    y = jnp.maximum(y, 0.0)
    f = y.reshape(B, -1)                       # channel-major flatten, like torch
    return f @ params["fc_w"].T + params["fc_b"]


if __name__ == "__main__":
    IN_CH, OUT_CH, COUT, K, FEAT = 4, 8, 4, 7, 64
    L = 16 + K - 1                 # conv output length 16 -> 4*16 = 64 FC features

    key = jax.random.PRNGKey(0)
    kx1, kx2, kp = jax.random.split(key, 3)
    params = init_params(kp, IN_CH, OUT_CH, cout=COUT, k=K, feat=FEAT)

    # 1) spec-sized batch (B=2), f32 MXU path: tight-tolerance semantics check.
    x_small = jax.random.normal(kx1, (2, IN_CH, L), jnp.float32)
    out = jax.block_until_ready(convnet_forward(x_small, params, mxu_dtype=jnp.float32))
    ref = convnet_ref(x_small, params)
    assert out.shape == (2, OUT_CH), out.shape
    assert jnp.allclose(out, ref, atol=1e-3, rtol=1e-3), (out, ref)

    # 2) multi-tile batch: exercises batch tiling, two-phase global BN stats, pad masking.
    x_big = jax.random.normal(kx2, (300, IN_CH, L), jnp.float32)
    ref_big = convnet_ref(x_big, params)
    out_big = jax.block_until_ready(
        convnet_forward(x_big, params, mxu_dtype=jnp.float32, batch_tile=128))
    assert jnp.allclose(out_big, ref_big, atol=1e-3, rtol=1e-3)

    # 3) default perf path (bf16 MXU inputs, f32 statistics/accumulation) vs f32 reference.
    out_bf16 = jax.block_until_ready(convnet_forward(x_big, params, batch_tile=128))
    assert jnp.allclose(out_bf16, ref_big, atol=3e-2, rtol=3e-2)

    print("KERNEL_OK")
</pallas_src>

<mosaic_0001>
module attributes {stable_mosaic.version = 11 : i64} {
  func.func @convnet_kernel(%arg0: i32, %arg1: i32, %arg2: memref<88x2xf32, #tpu.memory_space<vmem>>, %arg3: memref<64x88xf32, #tpu.memory_space<vmem>>, %arg4: memref<4x2xf32, #tpu.memory_space<vmem>>, %arg5: memref<64x4xf32, #tpu.memory_space<vmem>>, %arg6: memref<4x64xf32, #tpu.memory_space<vmem>>, %arg7: memref<8x64xf32, #tpu.memory_space<vmem>>, %arg8: memref<8x1xf32, #tpu.memory_space<vmem>>, %arg9: memref<8x2xf32, #tpu.memory_space<vmem>>, %arg10: memref<64x1xf32, #tpu.memory_space<vmem>>, %arg11: memref<64x1xf32, #tpu.memory_space<vmem>>) attributes {dimension_semantics = [#tpu.dimension_semantics<arbitrary>, #tpu.dimension_semantics<arbitrary>], iteration_bounds = array<i64: 2, 1>, scalar_prefetch = 0 : i64, scratch_operands = 2 : i64, tpu.core_type = #tpu.core_type<tc>, window_params = [{transform_indices = @transform_0, window_bounds = array<i64: 88, 2>}, {pipeline_mode = #tpu.pipeline_mode<synchronous>, transform_indices = @transform_1, window_bounds = array<i64: 64, 88>}, {pipeline_mode = #tpu.pipeline_mode<synchronous>, transform_indices = @transform_2, window_bounds = array<i64: 4, 2>}, {pipeline_mode = #tpu.pipeline_mode<synchronous>, transform_indices = @transform_3, window_bounds = array<i64: 64, 4>}, {pipeline_mode = #tpu.pipeline_mode<synchronous>, transform_indices = @transform_4, window_bounds = array<i64: 4, 64>}, {pipeline_mode = #tpu.pipeline_mode<synchronous>, transform_indices = @transform_5, window_bounds = array<i64: 8, 64>}, {pipeline_mode = #tpu.pipeline_mode<synchronous>, transform_indices = @transform_6, window_bounds = array<i64: 8, 1>}, {transform_indices = @transform_7, window_bounds = array<i64: 8, 2>}]} {
    %c0 = arith.constant 0 : index
    %c0_0 = arith.constant 0 : index
    %0 = vector.load %arg3[%c0, %c0_0] : memref<64x88xf32, #tpu.memory_space<vmem>>, vector<64x88xf32>
    %c0_1 = arith.constant 0 : index
    %c0_2 = arith.constant 0 : index
    %1 = vector.load %arg2[%c0_1, %c0_2] : memref<88x2xf32, #tpu.memory_space<vmem>>, vector<88x2xf32>
    %cst = arith.constant dense<0.000000e+00> : vector<64x2xf32>
    %2 = tpu.matmul %0, %1, %cst {dimension_numbers = #tpu.dot_dimension_numbers<[1], [0], [0], [1], [0, 0, 1, 1], [], []>} : vector<64x88xf32>, vector<88x2xf32>, vector<64x2xf32> -> vector<64x2xf32>
    %c0_i32 = arith.constant 0 : i32
    %3 = arith.cmpi eq, %arg0, %c0_i32 : i32
    %4 = arith.extui %3 : i1 to i32
    %c0_i32_3 = arith.constant 0 : i32
    %5 = arith.cmpi ne, %4, %c0_i32_3 : i32
    scf.if %5 {
      %c0_i32_5 = arith.constant 0 : i32
      %9 = arith.cmpi eq, %arg1, %c0_i32_5 : i32
      %10 = arith.extui %9 : i1 to i32
      %c0_i32_6 = arith.constant 0 : i32
      %11 = arith.cmpi ne, %10, %c0_i32_6 : i32
      scf.if %11 {
        %cst_22 = arith.constant 0.000000e+00 : f32
        %28 = vector.broadcast %cst_22 : f32 to vector<64x1xf32>
        %c0_23 = arith.constant 0 : index
        %c0_24 = arith.constant 0 : index
        %29 = vector.load %arg10[%c0_23, %c0_24] : memref<64x1xf32, #tpu.memory_space<vmem>>, vector<64x1xf32>
        tpu.vector_store %arg10[%c0_23, %c0_24], %28 {strides = array<i32>} : memref<64x1xf32, #tpu.memory_space<vmem>>, vector<64x1xf32>,
        %cst_25 = arith.constant 0.000000e+00 : f32
        %30 = vector.broadcast %cst_25 : f32 to vector<64x1xf32>
        %c0_26 = arith.constant 0 : index
        %c0_27 = arith.constant 0 : index
        %31 = vector.load %arg11[%c0_26, %c0_27] : memref<64x1xf32, #tpu.memory_space<vmem>>, vector<64x1xf32>
        tpu.vector_store %arg11[%c0_26, %c0_27], %30 {strides = array<i32>} : memref<64x1xf32, #tpu.memory_space<vmem>>, vector<64x1xf32>,
      } else {
      }
      %c0_7 = arith.constant 0 : index
      %c0_8 = arith.constant 0 : index
      %12 = vector.load %arg10[%c0_7, %c0_8] : memref<64x1xf32, #tpu.memory_space<vmem>>, vector<64x1xf32>
      %cst_9 = arith.constant dense<0.000000e+00> : vector<64xf32>
      %13 = vector.multi_reduction <add>, %2, %cst_9 [1] : vector<64x2xf32> to vector<64xf32>
      %14 = vector.shape_cast %13 : vector<64xf32> to vector<64x1xf32>
      %15 = arith.addf %12, %14 : vector<64x1xf32>
      %c0_10 = arith.constant 0 : index
      %c0_11 = arith.constant 0 : index
      %16 = vector.load %arg10[%c0_10, %c0_11] : memref<64x1xf32, #tpu.memory_space<vmem>>, vector<64x1xf32>
      tpu.vector_store %arg10[%c0_10, %c0_11], %15 {strides = array<i32>} : memref<64x1xf32, #tpu.memory_space<vmem>>, vector<64x1xf32>,
      %c0_12 = arith.constant 0 : index
      %c0_13 = arith.constant 0 : index
      %17 = vector.load %arg11[%c0_12, %c0_13] : memref<64x1xf32, #tpu.memory_space<vmem>>, vector<64x1xf32>
      %18 = arith.mulf %2, %2 : vector<64x2xf32>
      %cst_14 = arith.constant dense<0.000000e+00> : vector<64xf32>
      %19 = vector.multi_reduction <add>, %18, %cst_14 [1] : vector<64x2xf32> to vector<64xf32>
      %20 = vector.shape_cast %19 : vector<64xf32> to vector<64x1xf32>
      %21 = arith.addf %17, %20 : vector<64x1xf32>
      %c0_15 = arith.constant 0 : index
      %c0_16 = arith.constant 0 : index
      %22 = vector.load %arg11[%c0_15, %c0_16] : memref<64x1xf32, #tpu.memory_space<vmem>>, vector<64x1xf32>
      tpu.vector_store %arg11[%c0_15, %c0_16], %21 {strides = array<i32>} : memref<64x1xf32, #tpu.memory_space<vmem>>, vector<64x1xf32>,
      %c0_i32_17 = arith.constant 0 : i32
      %23 = arith.cmpi eq, %arg1, %c0_i32_17 : i32
      %24 = arith.extui %23 : i1 to i32
      %c0_i32_18 = arith.constant 0 : i32
      %25 = arith.cmpi ne, %24, %c0_i32_18 : i32
      scf.if %25 {
        %c0_22 = arith.constant 0 : index
        %c0_23 = arith.constant 0 : index
        %28 = vector.load %arg6[%c0_22, %c0_23] : memref<4x64xf32, #tpu.memory_space<vmem>>, vector<4x64xf32>
        %c0_24 = arith.constant 0 : index
        %c0_25 = arith.constant 0 : index
        %29 = vector.load %arg10[%c0_24, %c0_25] : memref<64x1xf32, #tpu.memory_space<vmem>>, vector<64x1xf32>
        %cst_26 = arith.constant dense<0.000000e+00> : vector<4x1xf32>
        %30 = tpu.matmul %28, %29, %cst_26 {dimension_numbers = #tpu.dot_dimension_numbers<[1], [0], [0], [1], [0, 0, 1, 1], [], []>} : vector<4x64xf32>, vector<64x1xf32>, vector<4x1xf32> -> vector<4x1xf32>
        %c0_27 = arith.constant 0 : index
        %c0_28 = arith.constant 0 : index
        %31 = vector.load %arg6[%c0_27, %c0_28] : memref<4x64xf32, #tpu.memory_space<vmem>>, vector<4x64xf32>
        %c0_29 = arith.constant 0 : index
        %c0_30 = arith.constant 0 : index
        %32 = vector.load %arg11[%c0_29, %c0_30] : memref<64x1xf32, #tpu.memory_space<vmem>>, vector<64x1xf32>
        %cst_31 = arith.constant dense<0.000000e+00> : vector<4x1xf32>
        %33 = tpu.matmul %31, %32, %cst_31 {dimension_numbers = #tpu.dot_dimension_numbers<[1], [0], [0], [1], [0, 0, 1, 1], [], []>} : vector<4x64xf32>, vector<64x1xf32>, vector<4x1xf32> -> vector<4x1xf32>
        %cst_32 = arith.constant 3.200000e+01 : f32
        %34 = vector.broadcast %cst_32 : f32 to vector<4x1xf32>
        %35 = arith.divf %30, %34 : vector<4x1xf32>
        %cst_33 = arith.constant 3.200000e+01 : f32
        %36 = vector.broadcast %cst_33 : f32 to vector<4x1xf32>
        %37 = arith.divf %33, %36 : vector<4x1xf32>
        %38 = arith.mulf %35, %35 : vector<4x1xf32>
        %39 = arith.subf %37, %38 : vector<4x1xf32>
        %cst_34 = arith.constant 0.000000e+00 : f32
        %40 = vector.broadcast %cst_34 : f32 to vector<4x1xf32>
        %41 = arith.maximumf %39, %40 : vector<4x1xf32>
        %c0_35 = arith.constant 0 : index
        %c0_36 = arith.constant 0 : index
        %42 = vector.load %arg4[%c0_35, %c0_36] : memref<4x2xf32, #tpu.memory_space<vmem>>, vector<4x2xf32>
        %43 = vector.extract_strided_slice %42 {offsets = [0, 0], sizes = [4, 1], strides = [1, 1]} : vector<4x2xf32> to vector<4x1xf32>
        %cst_37 = arith.constant 9.99999974E-6 : f32
        %44 = vector.broadcast %cst_37 : f32 to vector<4x1xf32>
        %45 = arith.addf %41, %44 : vector<4x1xf32>
        %46 = math.rsqrt %45 : vector<4x1xf32>
        %47 = arith.mulf %43, %46 : vector<4x1xf32>
        %48 = vector.extract_strided_slice %42 {offsets = [0, 1], sizes = [4, 1], strides = [1, 1]} : vector<4x2xf32> to vector<4x1xf32>
        %49 = arith.mulf %35, %47 : vector<4x1xf32>
        %50 = arith.subf %48, %49 : vector<4x1xf32>
        %c0_38 = arith.constant 0 : index
        %c0_39 = arith.constant 0 : index
        %51 = vector.load %arg5[%c0_38, %c0_39] : memref<64x4xf32, #tpu.memory_space<vmem>>, vector<64x4xf32>
        %cst_40 = arith.constant dense<0.000000e+00> : vector<64x1xf32>
        %52 = tpu.matmul %51, %47, %cst_40 {dimension_numbers = #tpu.dot_dimension_numbers<[1], [0], [0], [1], [0, 0, 1, 1], [], []>} : vector<64x4xf32>, vector<4x1xf32>, vector<64x1xf32> -> vector<64x1xf32>
        %c0_41 = arith.constant 0 : index
        %c0_42 = arith.constant 0 : index
        %53 = vector.load %arg10[%c0_41, %c0_42] : memref<64x1xf32, #tpu.memory_space<vmem>>, vector<64x1xf32>
        tpu.vector_store %arg10[%c0_41, %c0_42], %52 {strides = array<i32>} : memref<64x1xf32, #tpu.memory_space<vmem>>, vector<64x1xf32>,
        %c0_43 = arith.constant 0 : index
        %c0_44 = arith.constant 0 : index
        %54 = vector.load %arg5[%c0_43, %c0_44] : memref<64x4xf32, #tpu.memory_space<vmem>>, vector<64x4xf32>
        %cst_45 = arith.constant dense<0.000000e+00> : vector<64x1xf32>
        %55 = tpu.matmul %54, %50, %cst_45 {dimension_numbers = #tpu.dot_dimension_numbers<[1], [0], [0], [1], [0, 0, 1, 1], [], []>} : vector<64x4xf32>, vector<4x1xf32>, vector<64x1xf32> -> vector<64x1xf32>
        %c0_46 = arith.constant 0 : index
        %c0_47 = arith.constant 0 : index
        %56 = vector.load %arg11[%c0_46, %c0_47] : memref<64x1xf32, #tpu.memory_space<vmem>>, vector<64x1xf32>
        tpu.vector_store %arg11[%c0_46, %c0_47], %55 {strides = array<i32>} : memref<64x1xf32, #tpu.memory_space<vmem>>, vector<64x1xf32>,
      } else {
      }
      %cst_19 = arith.constant 0.000000e+00 : f32
      %26 = vector.broadcast %cst_19 : f32 to vector<8x2xf32>
      %c0_20 = arith.constant 0 : index
      %c0_21 = arith.constant 0 : index
      %27 = vector.load %arg9[%c0_20, %c0_21] : memref<8x2xf32, #tpu.memory_space<vmem>>, vector<8x2xf32>
      tpu.vector_store %arg9[%c0_20, %c0_21], %26 {strides = array<i32>} : memref<8x2xf32, #tpu.memory_space<vmem>>, vector<8x2xf32>,
    } else {
    }
    %c1_i32 = arith.constant 1 : i32
    %6 = arith.cmpi eq, %arg0, %c1_i32 : i32
    %7 = arith.extui %6 : i1 to i32
    %c0_i32_4 = arith.constant 0 : i32
    %8 = arith.cmpi ne, %7, %c0_i32_4 : i32
    scf.if %8 {
      %c0_5 = arith.constant 0 : index
      %c0_6 = arith.constant 0 : index
      %9 = vector.load %arg10[%c0_5, %c0_6] : memref<64x1xf32, #tpu.memory_space<vmem>>, vector<64x1xf32>
      %10 = vector.broadcast %9 : vector<64x1xf32> to vector<64x2xf32>
      %11 = arith.mulf %2, %10 : vector<64x2xf32>
      %c0_7 = arith.constant 0 : index
      %c0_8 = arith.constant 0 : index
      %12 = vector.load %arg11[%c0_7, %c0_8] : memref<64x1xf32, #tpu.memory_space<vmem>>, vector<64x1xf32>
      %13 = vector.broadcast %12 : vector<64x1xf32> to vector<64x2xf32>
      %14 = arith.addf %11, %13 : vector<64x2xf32>
      %cst_9 = arith.constant 0.000000e+00 : f32
      %15 = vector.broadcast %cst_9 : f32 to vector<64x2xf32>
      %16 = arith.maximumf %14, %15 : vector<64x2xf32>
      %c0_10 = arith.constant 0 : index
      %c0_11 = arith.constant 0 : index
      %17 = vector.load %arg7[%c0_10, %c0_11] : memref<8x64xf32, #tpu.memory_space<vmem>>, vector<8x64xf32>
      %cst_12 = arith.constant dense<0.000000e+00> : vector<8x2xf32>
      %18 = tpu.matmul %17, %16, %cst_12 {dimension_numbers = #tpu.dot_dimension_numbers<[1], [0], [0], [1], [0, 0, 1, 1], [], []>} : vector<8x64xf32>, vector<64x2xf32>, vector<8x2xf32> -> vector<8x2xf32>
      %c0_13 = arith.constant 0 : index
      %c0_14 = arith.constant 0 : index
      %19 = vector.load %arg8[%c0_13, %c0_14] : memref<8x1xf32, #tpu.memory_space<vmem>>, vector<8x1xf32>
      %20 = vector.broadcast %19 : vector<8x1xf32> to vector<8x2xf32>
      %21 = arith.addf %18, %20 : vector<8x2xf32>
      %c0_15 = arith.constant 0 : index
      %c0_16 = arith.constant 0 : index
      %22 = vector.load %arg9[%c0_15, %c0_16] : memref<8x2xf32, #tpu.memory_space<vmem>>, vector<8x2xf32>
      tpu.vector_store %arg9[%c0_15, %c0_16], %21 {strides = array<i32>} : memref<8x2xf32, #tpu.memory_space<vmem>>, vector<8x2xf32>,
    } else {
    }
    return
  }
  func.func @transform_0(%arg0: i32, %arg1: i32) -> (i32, i32) {
    %c0_i32 = arith.constant 0 : i32
    %c0_i32_0 = arith.constant 0 : i32
    return %c0_i32, %arg1 : i32, i32
  }
  func.func @transform_1(%arg0: i32, %arg1: i32) -> (i32, i32) {
    %c0_i32 = arith.constant 0 : i32
    %c0_i32_0 = arith.constant 0 : i32
    %c0_i32_1 = arith.constant 0 : i32
    return %c0_i32, %c0_i32_0 : i32, i32
  }
  func.func @transform_2(%arg0: i32, %arg1: i32) -> (i32, i32) {
    %c0_i32 = arith.constant 0 : i32
    %c0_i32_0 = arith.constant 0 : i32
    %c0_i32_1 = arith.constant 0 : i32
    return %c0_i32, %c0_i32_0 : i32, i32
  }
  func.func @transform_3(%arg0: i32, %arg1: i32) -> (i32, i32) {
    %c0_i32 = arith.constant 0 : i32
    %c0_i32_0 = arith.constant 0 : i32
    %c0_i32_1 = arith.constant 0 : i32
    return %c0_i32, %c0_i32_0 : i32, i32
  }
  func.func @transform_4(%arg0: i32, %arg1: i32) -> (i32, i32) {
    %c0_i32 = arith.constant 0 : i32
    %c0_i32_0 = arith.constant 0 : i32
    %c0_i32_1 = arith.constant 0 : i32
    return %c0_i32, %c0_i32_0 : i32, i32
  }
  func.func @transform_5(%arg0: i32, %arg1: i32) -> (i32, i32) {
    %c0_i32 = arith.constant 0 : i32
    %c0_i32_0 = arith.constant 0 : i32
    %c0_i32_1 = arith.constant 0 : i32
    return %c0_i32, %c0_i32_0 : i32, i32
  }
  func.func @transform_6(%arg0: i32, %arg1: i32) -> (i32, i32) {
    %c0_i32 = arith.constant 0 : i32
    %c0_i32_0 = arith.constant 0 : i32
    %c0_i32_1 = arith.constant 0 : i32
    return %c0_i32, %c0_i32_0 : i32, i32
  }
  func.func @transform_7(%arg0: i32, %arg1: i32) -> (i32, i32) {
    %c0_i32 = arith.constant 0 : i32
    %c0_i32_0 = arith.constant 0 : i32
    return %c0_i32, %arg1 : i32, i32
  }
}

</mosaic_0001>

<llo_original>
// kernel: tpu_custom_call.1
$region0: #{tpu_custom_call.1}
  #allocation0 [shape = 'u32[]', space=smem, size = 0x4, offset = 0x4, fixed_abs, tag = 'smem constant byte address 0x4 - core index']
  #allocation1 [shape = 'u32[144,128]{1,0:T(1,128)}', space=vmem, size = 0x12000, scoped, tag = 'internal scratch']
  #allocation2 [shape = 'f32[64,1]{1,0:T(8,128)}', space=vmem, size = 0x8000, scoped, tag = 'scratch operand']
  #allocation3 [shape = 'f32[64,1]{1,0:T(8,128)}', space=vmem, size = 0x8000, scoped, tag = 'scratch operand']
  %s0 = inlined_call_operand.vmem [shape: f32[88,2], index: 0, kind: input, shape index: {}]
  %s1 = inlined_call_operand.vmem [shape: f32[64,88], index: 1, kind: input, shape index: {}]
  %s2 = inlined_call_operand.vmem [shape: f32[4,2], index: 2, kind: input, shape index: {}]
  %s3 = inlined_call_operand.vmem [shape: f32[64,4], index: 3, kind: input, shape index: {}]
  %s4 = inlined_call_operand.vmem [shape: f32[4,64], index: 4, kind: input, shape index: {}]
  %s5 = inlined_call_operand.vmem [shape: f32[8,64], index: 5, kind: input, shape index: {}]
  %s6 = inlined_call_operand.vmem [shape: f32[8,1], index: 6, kind: input, shape index: {}]
  %s7 = inlined_call_operand.vmem [shape: f32[8,2], index: 7, kind: output, shape index: {}]
  %s8 = sld [smem:[#allocation0]]
  $region77: #{tpu_custom_call.1} parent=0
    _
  %s10 = ssub.s32 1, %s8
  %s11 = scalar_select 0, %s10, %s8
  loop: start=0, step=1, limit=4
  $region2: #{tpu_custom_call.1} parent=0 // loop_pre_header
    _
  $region3: #{tpu_custom_call.1} parent=0 // loop_header
    %s13 = sphi 0, %s17
    %p14 = scmp.ge.s32.totalorder %s13, 4
    %s20 = sphi 0, %s32
    %s21 = sphi 0, %s28
    %s22 = sphi 0, %s20
    %s23 = sphi 0, %s21
    %s24 = sphi 0, %s22
    %s25 = sphi 0, %s23
    %s35 = sphi 0, %s37
    %s38 = sphi 0, %s35
    %s39 = sphi 0, %s38
    %s55 = sphi 0, %s39
    %s59 = sphi 0, %s59
    %s61 = sphi 0, %s59
    %s62 = sphi 0, %s61
    %s76 = sphi 0, %s62
    %s80 = sphi 0, %s80
    %s82 = sphi 0, %s80
    %s83 = sphi 0, %s82
    %s97 = sphi 0, %s83
    %s101 = sphi 0, %s101
    %s103 = sphi 0, %s101
    %s104 = sphi 0, %s103
    %s118 = sphi 0, %s104
    %s122 = sphi 0, %s122
    %s124 = sphi 0, %s122
    %s125 = sphi 0, %s124
    %s139 = sphi 0, %s125
    %s143 = sphi 0, %s143
    %s145 = sphi 0, %s143
    %s146 = sphi 0, %s145
    %s160 = sphi 0, %s146
    %s164 = sphi 0, %s164
    %s166 = sphi 0, %s164
    %s167 = sphi 0, %s166
    %s181 = sphi 0, %s167
    %s187 = sphi 0, %s189
    %s190 = sphi 0, %s187
    %s191 = sphi 0, %s190
    %s207 = sphi 0, %s191
  $region4: #{tpu_custom_call.1} parent=0 // loop_header_branch
    %16 = sbr.rel (%p14) target = $region8
  $region5: #{tpu_custom_call.1} parent=0 // loop_body
    %s18 = ssub.s32 %s13, 1
    %s19 = ssub.s32 %s13, 2
    %s26 = sadd.s32 1, %s21
    %p27 = scmp.ge.s32.totalorder %s26, 1
    %s28 = scalar_select %p27, 0, %s26
    %s29 = sadd.s32 1, %s20
    %s30 = scalar_select %p27, %s29, %s20
    %p31 = scmp.ge.s32.totalorder %s30, 2
    %s32 = scalar_select %p31, 0, %s30
    %s33 = ssub.s32 %s21, %s28
    %p34 = scmp.eq.s32.totalorder %s33, 0
    %s36 = sadd.s32 %s35, 1
    %s37 = scalar_select %p34, %s35, %s36
    %p40 = pneg %p34
    %p41 = scmp.eq.s32.totalorder %s13, 1
    %p42 = por %p40, %p41
    %p43 = scmp.ne.s32.totalorder %s35, %s38
    %p44 = scmp.eq.s32.totalorder %s13, 0
    %p45 = por %p43, %p44
    %p46 = scmp.ne.s32.totalorder %s35, %s38
    %p47 = scmp.eq.s32.totalorder %s18, 1
    %p48 = por %p46, %p47
    %p49 = scmp.ne.s32.totalorder %s38, %s39
    %p50 = scmp.eq.s32.totalorder %s18, 0
    %p51 = por %p49, %p50
    %p52 = scmp.ne.s32.totalorder %s38, %s39
    %p53 = scmp.eq.s32.totalorder %s19, 1
    %p54 = por %p52, %p53
    %p56 = scmp.ne.s32.totalorder %s39, %s55
    %p57 = scmp.eq.s32.totalorder %s19, 0
    %p58 = por %p56, %p57
    %s60 = sadd.s32 %s59, 1
    %p63 = scmp.eq.s32.totalorder %s13, 1
    %p64 = scmp.ne.s32.totalorder %s59, %s61
    %p65 = scmp.eq.s32.totalorder %s13, 0
    %p66 = por %p64, %p65
    %p67 = scmp.ne.s32.totalorder %s59, %s61
    %p68 = scmp.eq.s32.totalorder %s18, 1
    %p69 = por %p67, %p68
    %p70 = scmp.ne.s32.totalorder %s61, %s62
    %p71 = scmp.eq.s32.totalorder %s18, 0
    %p72 = por %p70, %p71
    %p73 = scmp.ne.s32.totalorder %s61, %s62
    %p74 = scmp.eq.s32.totalorder %s19, 1
    %p75 = por %p73, %p74
    %p77 = scmp.ne.s32.totalorder %s62, %s76
    %p78 = scmp.eq.s32.totalorder %s19, 0
    %p79 = por %p77, %p78
    %s81 = sadd.s32 %s80, 1
    %p84 = scmp.eq.s32.totalorder %s13, 1
    %p85 = scmp.ne.s32.totalorder %s80, %s82
    %p86 = scmp.eq.s32.totalorder %s13, 0
    %p87 = por %p85, %p86
    %p88 = scmp.ne.s32.totalorder %s80, %s82
    %p89 = scmp.eq.s32.totalorder %s18, 1
    %p90 = por %p88, %p89
    %p91 = scmp.ne.s32.totalorder %s82, %s83
    %p92 = scmp.eq.s32.totalorder %s18, 0
    %p93 = por %p91, %p92
    %p94 = scmp.ne.s32.totalorder %s82, %s83
    %p95 = scmp.eq.s32.totalorder %s19, 1
    %p96 = por %p94, %p95
    %p98 = scmp.ne.s32.totalorder %s83, %s97
    %p99 = scmp.eq.s32.totalorder %s19, 0
    %p100 = por %p98, %p99
    %s102 = sadd.s32 %s101, 1
    %p105 = scmp.eq.s32.totalorder %s13, 1
    %p106 = scmp.ne.s32.totalorder %s101, %s103
    %p107 = scmp.eq.s32.totalorder %s13, 0
    %p108 = por %p106, %p107
    %p109 = scmp.ne.s32.totalorder %s101, %s103
    %p110 = scmp.eq.s32.totalorder %s18, 1
    %p111 = por %p109, %p110
    %p112 = scmp.ne.s32.totalorder %s103, %s104
    %p113 = scmp.eq.s32.totalorder %s18, 0
    %p114 = por %p112, %p113
    %p115 = scmp.ne.s32.totalorder %s103, %s104
    %p116 = scmp.eq.s32.totalorder %s19, 1
    %p117 = por %p115, %p116
    %p119 = scmp.ne.s32.totalorder %s104, %s118
    %p120 = scmp.eq.s32.totalorder %s19, 0
    %p121 = por %p119, %p120
    %s123 = sadd.s32 %s122, 1
    %p126 = scmp.eq.s32.totalorder %s13, 1
    %p127 = scmp.ne.s32.totalorder %s122, %s124
    %p128 = scmp.eq.s32.totalorder %s13, 0
    %p129 = por %p127, %p128
    %p130 = scmp.ne.s32.totalorder %s122, %s124
    %p131 = scmp.eq.s32.totalorder %s18, 1
    %p132 = por %p130, %p131
    %p133 = scmp.ne.s32.totalorder %s124, %s125
    %p134 = scmp.eq.s32.totalorder %s18, 0
    %p135 = por %p133, %p134
    %p136 = scmp.ne.s32.totalorder %s124, %s125
    %p137 = scmp.eq.s32.totalorder %s19, 1
    %p138 = por %p136, %p137
    %p140 = scmp.ne.s32.totalorder %s125, %s139
    %p141 = scmp.eq.s32.totalorder %s19, 0
    %p142 = por %p140, %p141
    %s144 = sadd.s32 %s143, 1
    %p147 = scmp.eq.s32.totalorder %s13, 1
    %p148 = scmp.ne.s32.totalorder %s143, %s145
    %p149 = scmp.eq.s32.totalorder %s13, 0
    %p150 = por %p148, %p149
    %p151 = scmp.ne.s32.totalorder %s143, %s145
    %p152 = scmp.eq.s32.totalorder %s18, 1
    %p153 = por %p151, %p152
    %p154 = scmp.ne.s32.totalorder %s145, %s146
    %p155 = scmp.eq.s32.totalorder %s18, 0
    %p156 = por %p154, %p155
    %p157 = scmp.ne.s32.totalorder %s145, %s146
    %p158 = scmp.eq.s32.totalorder %s19, 1
    %p159 = por %p157, %p158
    %p161 = scmp.ne.s32.totalorder %s146, %s160
    %p162 = scmp.eq.s32.totalorder %s19, 0
    %p163 = por %p161, %p162
    %s165 = sadd.s32 %s164, 1
    %p168 = scmp.eq.s32.totalorder %s13, 1
    %p169 = scmp.ne.s32.totalorder %s164, %s166
    %p170 = scmp.eq.s32.totalorder %s13, 0
    %p171 = por %p169, %p170
    %p172 = scmp.ne.s32.totalorder %s164, %s166
    %p173 = scmp.eq.s32.totalorder %s18, 1
    %p174 = por %p172, %p173
    %p175 = scmp.ne.s32.totalorder %s166, %s167
    %p176 = scmp.eq.s32.totalorder %s18, 0
    %p177 = por %p175, %p176
    %p178 = scmp.ne.s32.totalorder %s166, %s167
    %p179 = scmp.eq.s32.totalorder %s19, 1
    %p180 = por %p178, %p179
    %p182 = scmp.ne.s32.totalorder %s167, %s181
    %p183 = scmp.eq.s32.totalorder %s19, 0
    %p184 = por %p182, %p183
    %s185 = ssub.s32 %s21, %s28
    %p186 = scmp.eq.s32.totalorder %s185, 0
    %s188 = sadd.s32 %s187, 1
    %s189 = scalar_select %p186, %s187, %s188
    %p192 = pneg %p186
    %p193 = scmp.eq.s32.totalorder %s13, 1
    %p194 = por %p192, %p193
    %p195 = scmp.ne.s32.totalorder %s187, %s190
    %p196 = scmp.eq.s32.totalorder %s13, 0
    %p197 = por %p195, %p196
    %p198 = scmp.ne.s32.totalorder %s187, %s190
    %p199 = scmp.eq.s32.totalorder %s18, 1
    %p200 = por %p198, %p199
    %p201 = scmp.ne.s32.totalorder %s190, %s191
    %p202 = scmp.eq.s32.totalorder %s18, 0
    %p203 = por %p201, %p202
    %p204 = scmp.ne.s32.totalorder %s190, %s191
    %p205 = scmp.eq.s32.totalorder %s19, 1
    %p206 = por %p204, %p205
    %p208 = scmp.ne.s32.totalorder %s191, %s207
    %p209 = scmp.eq.s32.totalorder %s19, 0
    %p210 = por %p208, %p209
    %p211 = scmp.le.s32.totalorder 1, %s13
    %p212 = scmp.lt.s32.totalorder %s13, 3
    %p213 = pnand %p211, %p212
    %p214 = pneg %p213
    // Predicated region
    $region9: #{tpu_custom_call.1} parent=5 // pred_check
      _
    $region10: #{tpu_custom_call.1} parent=5 // pred_check_branch
      %216 = sbr.rel (%p213) target = $region12
    $region11: #{tpu_custom_call.1} parent=5 // pred_region
      %s217 = ssub.s32 %s13, 1
      // Predicated region
      $region13: #{tpu_custom_call.1} parent=11 // pred_check
        %p218 = pneg %p51
      $region14: #{tpu_custom_call.1} parent=11 // pred_check_branch
        %220 = sbr.rel (%p218) target = $region16
      $region15: #{tpu_custom_call.1} parent=11 // pred_region
        %p221 = scmp.lt.s32.totalorder %s23, 0
        %s222 = scalar_select %p221, %s23, 0
        %s223 = smul.addr %s222, 8
        %s224 = scalar_lea.vmem %s0, %s223
      $region16: #{tpu_custom_call.1} parent=11 // pred_fallthru
        _
      // Predicated region
      $region17: #{tpu_custom_call.1} parent=11 // pred_check
        %p225 = pneg %p72
      $region18: #{tpu_custom_call.1} parent=11 // pred_check_branch
        %227 = sbr.rel (%p225) target = $region20
      $region19: #{tpu_custom_call.1} parent=11 // pred_region
        _
      $region20: #{tpu_custom_call.1} parent=11 // pred_fallthru
        _
      // Predicated region
      $region21: #{tpu_custom_call.1} parent=11 // pred_check
        %p228 = pneg %p93
      $region22: #{tpu_custom_call.1} parent=11 // pred_check_branch
        %230 = sbr.rel (%p228) target = $region24
      $region23: #{tpu_custom_call.1} parent=11 // pred_region
        _
      $region24: #{tpu_custom_call.1} parent=11 // pred_fallthru
        _
      // Predicated region
      $region25: #{tpu_custom_call.1} parent=11 // pred_check
        %p231 = pneg %p114
      $region26: #{tpu_custom_call.1} parent=11 // pred_check_branch
        %233 = sbr.rel (%p231) target = $region28
      $region27: #{tpu_custom_call.1} parent=11 // pred_region
        _
      $region28: #{tpu_custom_call.1} parent=11 // pred_fallthru
        _
      // Predicated region
      $region29: #{tpu_custom_call.1} parent=11 // pred_check
        %p234 = pneg %p135
      $region30: #{tpu_custom_call.1} parent=11 // pred_check_branch
        %236 = sbr.rel (%p234) target = $region32
      $region31: #{tpu_custom_call.1} parent=11 // pred_region
        _
      $region32: #{tpu_custom_call.1} parent=11 // pred_fallthru
        _
      // Predicated region
      $region33: #{tpu_custom_call.1} parent=11 // pred_check
        %p237 = pneg %p156
      $region34: #{tpu_custom_call.1} parent=11 // pred_check_branch
        %239 = sbr.rel (%p237) target = $region36
      $region35: #{tpu_custom_call.1} parent=11 // pred_region
        _
      $region36: #{tpu_custom_call.1} parent=11 // pred_fallthru
        _
      // Predicated region
      $region37: #{tpu_custom_call.1} parent=11 // pred_check
        %p240 = pneg %p177
      $region38: #{tpu_custom_call.1} parent=11 // pred_check_branch
        %242 = sbr.rel (%p240) target = $region40
      $region39: #{tpu_custom_call.1} parent=11 // pred_region
        _
      $region40: #{tpu_custom_call.1} parent=11 // pred_fallthru
        _
    $region12: #{tpu_custom_call.1} parent=5 // pred_fallthru
      _
    %p243 = scmp.lt.s32.totalorder %s13, 2
    // Predicated region
    $region41: #{tpu_custom_call.1} parent=5 // pred_check
      %p244 = pneg %p243
    $region42: #{tpu_custom_call.1} parent=5 // pred_check_branch
      %246 = sbr.rel (%p244) target = $region44
    $region43: #{tpu_custom_call.1} parent=5 // pred_region
      _
    $region44: #{tpu_custom_call.1} parent=5 // pred_fallthru
      _
    %p247 = scmp.le.s32.totalorder 1, %s13
    %p248 = scmp.lt.s32.totalorder %s13, 3
    %p249 = pnand %p247, %p248
    %p250 = pneg %p249
    // Predicated region
    $region45: #{tpu_custom_call.1} parent=5 // pred_check
      _
    $region46: #{tpu_custom_call.1} parent=5 // pred_check_branch
      %252 = sbr.rel (%p249) target = $region48
    $region47: #{tpu_custom_call.1} parent=5 // pred_region
      %s253 = ssub.s32 %s13, 1
      %p254 = scmp.lt.s32.totalorder %s23, 0
      %s255 = scalar_select %p254, %s23, 0
      %s256 = smul.addr %s255, 8
      %s257 = scalar_lea.vmem %s0, %s256
      %p258 = pneg %p51
      %p259 = pneg %p48
      %p260 = pneg %p72
      %p261 = pneg %p69
      %p262 = pneg %p93
      %p263 = pneg %p90
      %p264 = pneg %p114
      %p265 = pneg %p111
      %p266 = pneg %p135
      %p267 = pneg %p132
      %p268 = pneg %p156
      %p269 = pneg %p153
      %p270 = pneg %p177
      %p271 = pneg %p174
      %p272 = pneg %p203
      %p273 = pneg %p200
      %p274 = scmp.lt.s32.totalorder %s23, 0
      %s275 = scalar_select %p274, %s23, 0
      %s276 = smul.addr %s275, 8
      %s277 = scalar_lea.vmem %s7, %s276
      %p278 = scmp.lt.s32.totalorder %s23, 0
      %s279 = scalar_select %p278, %s23, 0
      %s280 = smul.addr %s279, 8
      %s281 = scalar_lea.vmem %s0, %s280
      %p282 = scmp.lt.s32.totalorder %s23, 0
      %s283 = scalar_select %p282, %s23, 0
      %s284 = smul.addr %s283, 8
      %s285 = scalar_lea.vmem %s7, %s284
      %v286 = vld [vmem:[%s1] sm:$0xff]
      %v287 = vld [vmem:[%s1 + $0x8] sm:$0xff]
      %v288 = vld [vmem:[%s1 + $0x10] sm:$0xff]
      %v289 = vld [vmem:[%s1 + $0x18] sm:$0xff]
      %v290 = vld [vmem:[%s1 + $0x20] sm:$0xff]
      %v291 = vld [vmem:[%s1 + $0x28] sm:$0xff]
      %v292 = vld [vmem:[%s1 + $0x30] sm:$0xff]
      %v293 = vld [vmem:[%s1 + $0x38] sm:$0xff]
      %v294 = vld [vmem:[%s281] sm:$0xff]
      %v295 = vld [vmem:[%s281 + $0x8] sm:$0xff]
      %v296 = vld [vmem:[%s281 + $0x10] sm:$0xff]
      %v297 = vld [vmem:[%s281 + $0x18] sm:$0xff]
      %v298 = vld [vmem:[%s281 + $0x20] sm:$0xff]
      %v299 = vld [vmem:[%s281 + $0x28] sm:$0xff]
      %v300 = vld [vmem:[%s281 + $0x30] sm:$0xff]
      %v301 = vld [vmem:[%s281 + $0x38] sm:$0xff]
      %v302 = vld [vmem:[%s281 + $0x40] sm:$0xff]
      %v303 = vld [vmem:[%s281 + $0x48] sm:$0xff]
      %v304 = vld [vmem:[%s281 + $0x50] sm:$0xff]
      %vm305 = vcmask 719872
      %v307 = vsel %vm305, %v286, 0
      %v310 = vsel %vm305, %v287, 0
      %v313 = vsel %vm305, %v288, 0
      %v316 = vsel %vm305, %v289, 0
      %v319 = vsel %vm305, %v290, 0
      %v322 = vsel %vm305, %v291, 0
      %v325 = vsel %vm305, %v292, 0
      %v328 = vsel %vm305, %v293, 0
      %330 = vmatprep.subr.mxu0 0.0
      %331 = vmatpush1.msra.mxu0 %v294
      %332 = vmatprep.subr.mxu0 0.0
      %333 = vmatpush1.msra.mxu0 %v295
      %334 = vmatprep.subr.mxu0 0.0
      %335 = vmatpush1.msra.mxu0 %v296
      %336 = vmatprep.subr.mxu0 0.0
      %337 = vmatpush1.msra.mxu0 %v297
      %338 = vmatprep.subr.mxu0 0.0
      %339 = vmatpush1.msra.mxu0 %v298
      %340 = vmatprep.subr.mxu0 0.0
      %341 = vmatpush1.msra.mxu0 %v299
      %342 = vmatprep.subr.mxu0 0.0
      %343 = vmatpush1.msra.mxu0 %v300
      %344 = vmatprep.subr.mxu0 0.0
      %345 = vmatpush1.msra.mxu0 %v301
      %346 = vmatprep.subr.mxu0 0.0
      %347 = vmatpush1.msra.mxu0 %v302
      %348 = vmatprep.subr.mxu0 0.0
      %349 = vmatpush1.msra.mxu0 %v303
      %350 = vmatprep.subr.mxu0 0.0
      %351 = vmatpush1.msra.mxu0 %v304
      %352 = vmatprep.subr.mxu0 0.0
      %353 = vmatpush1.msra.mxu0 0.0
      %354 = vmatprep.subr.mxu0 0.0
      %355 = vmatpush1.msra.mxu0 0.0
      %356 = vmatprep.subr.mxu0 0.0
      %357 = vmatpush1.msra.mxu0 0.0
      %358 = vmatprep.subr.mxu0 0.0
      %359 = vmatpush1.msra.mxu0 0.0
      %360 = vmatprep.subr.mxu0 0.0
      %361 = vmatpush1.msra.mxu0 0.0
      %362 = vmatprep.subr.mxu0 0.0
      %363 = vmatpush1.msra.mxu0 0.0
      %364 = vmatprep.subr.mxu0 0.0
      %365 = vmatpush1.msra.mxu0 0.0
      %366 = vmatprep.subr.mxu0 0.0
      %367 = vmatpush1.msra.mxu0 0.0
      %368 = vmatprep.subr.mxu0 0.0
      %369 = vmatpush1.msra.mxu0 0.0
      %370 = vmatprep.subr.mxu0 0.0
      %371 = vmatpush1.msra.mxu0 0.0
      %372 = vmatprep.subr.mxu0 0.0
      %373 = vmatpush1.msra.mxu0 0.0
      %374 = vmatprep.subr.mxu0 0.0
      %375 = vmatpush1.msra.mxu0 0.0
      %376 = vmatprep.subr.mxu0 0.0
      %377 = vmatpush1.msra.mxu0 0.0
      %378 = vmatprep.subr.mxu0 0.0
      %379 = vmatpush1.msra.mxu0 0.0
      %380 = vmatprep.subr.mxu0 0.0
      %381 = vmatpush1.msra.mxu0 0.0
      %382 = vmatprep.subr.mxu0 0.0
      %383 = vmatpush1.msra.mxu0 0.0
      %384 = vmatprep.subr.mxu0 0.0
      %385 = vmatpush1.msra.mxu0 0.0
      %386 = vmatprep.subr.mxu0 0.0
      %387 = vmatpush1.msra.mxu0 0.0
      %388 = vmatprep.subr.mxu0 0.0
      %389 = vmatpush1.msra.mxu0 0.0
      %390 = vmatprep.subr.mxu0 0.0
      %391 = vmatpush1.msra.mxu0 0.0
      %392 = vmatprep.subr.mxu0 0.0
      %393 = vmatpush1.msra.mxu0 0.0
      %394 = vmatprep.mubr.f32.mxu0 0.0
      %395 = vmatmul.mubr.f32.gmra.mrb[0].mxu0 %v307
      %v396 = vpop.f32.mrb[0].mxu0
      %v397 = vadd.f32 0.0, %v396
      %v398 = vpop.f32.mrb[0].mxu0
      %399 = vmatprep.mubr.f32.mxu0 0.0
      %400 = vmatmul.mubr.f32.gmra.mrb[0].mxu0 %v310
      %v401 = vpop.f32.mrb[0].mxu0
      %v402 = vadd.f32 0.0, %v401
      %v403 = vpop.f32.mrb[0].mxu0
      %404 = vmatprep.mubr.f32.mxu0 0.0
      %405 = vmatmul.mubr.f32.gmra.mrb[0].mxu0 %v313
      %v406 = vpop.f32.mrb[0].mxu0
      %v407 = vadd.f32 0.0, %v406
      %v408 = vpop.f32.mrb[0].mxu0
      %409 = vmatprep.mubr.f32.mxu0 0.0
      %410 = vmatmul.mubr.f32.gmra.mrb[0].mxu0 %v316
      %v411 = vpop.f32.mrb[0].mxu0
      %v412 = vadd.f32 0.0, %v411
      %v413 = vpop.f32.mrb[0].mxu0
      %414 = vmatprep.mubr.f32.mxu0 0.0
      %415 = vmatmul.mubr.f32.gmra.mrb[0].mxu0 %v319
      %v416 = vpop.f32.mrb[0].mxu0
      %v417 = vadd.f32 0.0, %v416
      %v418 = vpop.f32.mrb[0].mxu0
      %419 = vmatprep.mubr.f32.mxu0 0.0
      %420 = vmatmul.mubr.f32.gmra.mrb[0].mxu0 %v322
      %v421 = vpop.f32.mrb[0].mxu0
      %v422 = vadd.f32 0.0, %v421
      %v423 = vpop.f32.mrb[0].mxu0
      %424 = vmatprep.mubr.f32.mxu0 0.0
      %425 = vmatmul.mubr.f32.gmra.mrb[0].mxu0 %v325
      %v426 = vpop.f32.mrb[0].mxu0
      %v427 = vadd.f32 0.0, %v426
      %v428 = vpop.f32.mrb[0].mxu0
      %429 = vmatprep.mubr.f32.mxu0 0.0
      %430 = vmatmul.mubr.f32.gmra.mrb[0].mxu0 %v328
      %v431 = vpop.f32.mrb[0].mxu0
      %v432 = vadd.f32 0.0, %v431
      %v433 = vpop.f32.mrb[0].mxu0
      %434 = vdwg.mxu0
      %p435 = scmp.eq.s32.totalorder %s22, 0
      // Predicated region
      $region49: #{tpu_custom_call.1} parent=47 // pred_check
        %p436 = pneg %p435
      $region50: #{tpu_custom_call.1} parent=47 // pred_check_branch
        %438 = sbr.rel (%p436) target = $region52
      $region51: #{tpu_custom_call.1} parent=47 // pred_region
        %p439 = scmp.eq.s32.totalorder %s23, 0
        // Predicated region
        $region53: #{tpu_custom_call.1} parent=51 // pred_check
          %p440 = pneg %p439
        $region54: #{tpu_custom_call.1} parent=51 // pred_check_branch
          %442 = sbr.rel (%p440) target = $region56
        $region55: #{tpu_custom_call.1} parent=51 // pred_region
          %vm443 = vcmask 7168
          %444 = vst.msk [vmem:[#allocation2] sm:$0xff] %vm443, 0.0
          %445 = vst.msk [vmem:[#allocation2 + $0x8] sm:$0xff] %vm443, 0.0
          %446 = vst.msk [vmem:[#allocation2 + $0x10] sm:$0xff] %vm443, 0.0
          %447 = vst.msk [vmem:[#allocation2 + $0x18] sm:$0xff] %vm443, 0.0
          %448 = vst.msk [vmem:[#allocation2 + $0x20] sm:$0xff] %vm443, 0.0
          %449 = vst.msk [vmem:[#allocation2 + $0x28] sm:$0xff] %vm443, 0.0
          %450 = vst.msk [vmem:[#allocation2 + $0x30] sm:$0xff] %vm443, 0.0
          %451 = vst.msk [vmem:[#allocation2 + $0x38] sm:$0xff] %vm443, 0.0
          %452 = vst.msk [vmem:[#allocation3] sm:$0xff] %vm443, 0.0
          %453 = vst.msk [vmem:[#allocation3 + $0x8] sm:$0xff] %vm443, 0.0
          %454 = vst.msk [vmem:[#allocation3 + $0x10] sm:$0xff] %vm443, 0.0
          %455 = vst.msk [vmem:[#allocation3 + $0x18] sm:$0xff] %vm443, 0.0
          %456 = vst.msk [vmem:[#allocation3 + $0x20] sm:$0xff] %vm443, 0.0
          %457 = vst.msk [vmem:[#allocation3 + $0x28] sm:$0xff] %vm443, 0.0
          %458 = vst.msk [vmem:[#allocation3 + $0x30] sm:$0xff] %vm443, 0.0
          %459 = vst.msk [vmem:[#allocation3 + $0x38] sm:$0xff] %vm443, 0.0
        $region56: #{tpu_custom_call.1} parent=51 // pred_fallthru
          _
        %v460 = vld [vmem:[#allocation2] sm:$0xff]
        %v461 = vld [vmem:[#allocation2 + $0x8] sm:$0xff]
        %v462 = vld [vmem:[#allocation2 + $0x10] sm:$0xff]
        %v463 = vld [vmem:[#allocation2 + $0x18] sm:$0xff]
        %v464 = vld [vmem:[#allocation2 + $0x20] sm:$0xff]
        %v465 = vld [vmem:[#allocation2 + $0x28] sm:$0xff]
        %v466 = vld [vmem:[#allocation2 + $0x30] sm:$0xff]
        %v467 = vld [vmem:[#allocation2 + $0x38] sm:$0xff]
        %vm468 = vcmask 15360
        %v469 = vsel %vm468, %v397, 0.0
        %470 = vadd.xlane.f32.xlu0 %v469
        %v471 = vpop.xlane.xlu0 %470
        %v472 = vsel %vm468, %v402, 0.0
        %473 = vadd.xlane.f32.xlu0 %v472
        %v474 = vpop.xlane.xlu0 %473
        %v475 = vsel %vm468, %v407, 0.0
        %476 = vadd.xlane.f32.xlu0 %v475
        %v477 = vpop.xlane.xlu0 %476
        %v478 = vsel %vm468, %v412, 0.0
        %479 = vadd.xlane.f32.xlu0 %v478
        %v480 = vpop.xlane.xlu0 %479
        %v481 = vsel %vm468, %v417, 0.0
        %482 = vadd.xlane.f32.xlu0 %v481
        %v483 = vpop.xlane.xlu0 %482
        %v484 = vsel %vm468, %v422, 0.0
        %485 = vadd.xlane.f32.xlu0 %v484
        %v486 = vpop.xlane.xlu0 %485
        %v487 = vsel %vm468, %v427, 0.0
        %488 = vadd.xlane.f32.xlu0 %v487
        %v489 = vpop.xlane.xlu0 %488
        %v490 = vsel %vm468, %v432, 0.0
        %491 = vadd.xlane.f32.xlu0 %v490
        %v492 = vpop.xlane.xlu0 %491
        %v493 = vadd.f32 %v460, %v471
        %v494 = vadd.f32 %v461, %v474
        %v495 = vadd.f32 %v462, %v477
        %v496 = vadd.f32 %v463, %v480
        %v497 = vadd.f32 %v464, %v483
        %v498 = vadd.f32 %v465, %v486
        %v499 = vadd.f32 %v466, %v489
        %v500 = vadd.f32 %v467, %v492
        %vm501 = vcmask 7168
        %502 = vst.msk [vmem:[#allocation2] sm:$0xff] %vm501, %v493
        %503 = vst.msk [vmem:[#allocation2 + $0x8] sm:$0xff] %vm501, %v494
        %504 = vst.msk [vmem:[#allocation2 + $0x10] sm:$0xff] %vm501, %v495
        %505 = vst.msk [vmem:[#allocation2 + $0x18] sm:$0xff] %vm501, %v496
        %506 = vst.msk [vmem:[#allocation2 + $0x20] sm:$0xff] %vm501, %v497
        %507 = vst.msk [vmem:[#allocation2 + $0x28] sm:$0xff] %vm501, %v498
        %508 = vst.msk [vmem:[#allocation2 + $0x30] sm:$0xff] %vm501, %v499
        %509 = vst.msk [vmem:[#allocation2 + $0x38] sm:$0xff] %vm501, %v500
        %v510 = vld [vmem:[#allocation3] sm:$0xff]
        %v511 = vld [vmem:[#allocation3 + $0x8] sm:$0xff]
        %v512 = vld [vmem:[#allocation3 + $0x10] sm:$0xff]
        %v513 = vld [vmem:[#allocation3 + $0x18] sm:$0xff]
        %v514 = vld [vmem:[#allocation3 + $0x20] sm:$0xff]
        %v515 = vld [vmem:[#allocation3 + $0x28] sm:$0xff]
        %v516 = vld [vmem:[#allocation3 + $0x30] sm:$0xff]
        %v517 = vld [vmem:[#allocation3 + $0x38] sm:$0xff]
        %v518 = vmul.f32 %v397, %v397
        %v519 = vmul.f32 %v402, %v402
        %v520 = vmul.f32 %v407, %v407
        %v521 = vmul.f32 %v412, %v412
        %v522 = vmul.f32 %v417, %v417
        %v523 = vmul.f32 %v422, %v422
        %v524 = vmul.f32 %v427, %v427
        %v525 = vmul.f32 %v432, %v432
        %v526 = vsel %vm468, %v518, 0.0
        %527 = vadd.xlane.f32.xlu0 %v526
        %v528 = vpop.xlane.xlu0 %527
        %v529 = vsel %vm468, %v519, 0.0
        %530 = vadd.xlane.f32.xlu0 %v529
        %v531 = vpop.xlane.xlu0 %530
        %v532 = vsel %vm468, %v520, 0.0
        %533 = vadd.xlane.f32.xlu0 %v532
        %v534 = vpop.xlane.xlu0 %533
        %v535 = vsel %vm468, %v521, 0.0
        %536 = vadd.xlane.f32.xlu0 %v535
        %v537 = vpop.xlane.xlu0 %536
        %v538 = vsel %vm468, %v522, 0.0
        %539 = vadd.xlane.f32.xlu0 %v538
        %v540 = vpop.xlane.xlu0 %539
        %v541 = vsel %vm468, %v523, 0.0
        %542 = vadd.xlane.f32.xlu0 %v541
        %v543 = vpop.xlane.xlu0 %542
        %v544 = vsel %vm468, %v524, 0.0
        %545 = vadd.xlane.f32.xlu0 %v544
        %v546 = vpop.xlane.xlu0 %545
        %v547 = vsel %vm468, %v525, 0.0
        %548 = vadd.xlane.f32.xlu0 %v547
        %v549 = vpop.xlane.xlu0 %548
        %v550 = vadd.f32 %v510, %v528
        %v551 = vadd.f32 %v511, %v531
        %v552 = vadd.f32 %v512, %v534
        %v553 = vadd.f32 %v513, %v537
        %v554 = vadd.f32 %v514, %v540
        %v555 = vadd.f32 %v515, %v543
        %v556 = vadd.f32 %v516, %v546
        %v557 = vadd.f32 %v517, %v549
        %558 = vst.msk [vmem:[#allocation3] sm:$0xff] %vm501, %v550
        %559 = vst.msk [vmem:[#allocation3 + $0x8] sm:$0xff] %vm501, %v551
        %560 = vst.msk [vmem:[#allocation3 + $0x10] sm:$0xff] %vm501, %v552
        %561 = vst.msk [vmem:[#allocation3 + $0x18] sm:$0xff] %vm501, %v553
        %562 = vst.msk [vmem:[#allocation3 + $0x20] sm:$0xff] %vm501, %v554
        %563 = vst.msk [vmem:[#allocation3 + $0x28] sm:$0xff] %vm501, %v555
        %564 = vst.msk [vmem:[#allocation3 + $0x30] sm:$0xff] %vm501, %v556
        %565 = vst.msk [vmem:[#allocation3 + $0x38] sm:$0xff] %vm501, %v557
        // Predicated region
        $region57: #{tpu_custom_call.1} parent=51 // pred_check
          %p566 = pneg %p439
        $region58: #{tpu_custom_call.1} parent=51 // pred_check_branch
          %568 = sbr.rel (%p566) target = $region60
        $region59: #{tpu_custom_call.1} parent=51 // pred_region
          %v569 = vld [vmem:[%s4] sm:$0xf]
          %v570 = vld [vmem:[#allocation2] sm:$0xff]
          %v571 = vld [vmem:[#allocation2 + $0x8] sm:$0xff]
          %v572 = vld [vmem:[#allocation2 + $0x10] sm:$0xff]
          %v573 = vld [vmem:[#allocation2 + $0x18] sm:$0xff]
          %v574 = vld [vmem:[#allocation2 + $0x20] sm:$0xff]
          %v575 = vld [vmem:[#allocation2 + $0x28] sm:$0xff]
          %v576 = vld [vmem:[#allocation2 + $0x30] sm:$0xff]
          %v577 = vld [vmem:[#allocation2 + $0x38] sm:$0xff]
          %vm578 = vcmask 523264
          %v580 = vsel %vm578, %v569, 0
          %582 = vmatprep.subr.mxu0 0.0
          %583 = vmatpush1.msra.mxu0 %v570
          %584 = vmatprep.subr.mxu0 0.0
          %585 = vmatpush1.msra.mxu0 %v571
          %586 = vmatprep.subr.mxu0 0.0
          %587 = vmatpush1.msra.mxu0 %v572
          %588 = vmatprep.subr.mxu0 0.0
          %589 = vmatpush1.msra.mxu0 %v573
          %590 = vmatprep.subr.mxu0 0.0
          %591 = vmatpush1.msra.mxu0 %v574
          %592 = vmatprep.subr.mxu0 0.0
          %593 = vmatpush1.msra.mxu0 %v575
          %594 = vmatprep.subr.mxu0 0.0
          %595 = vmatpush1.msra.mxu0 %v576
          %596 = vmatprep.subr.mxu0 0.0
          %597 = vmatpush1.msra.mxu0 %v577
          %598 = vmatprep.subr.mxu0 0.0
          %599 = vmatpush1.msra.mxu0 0.0
          %600 = vmatprep.subr.mxu0 0.0
          %601 = vmatpush1.msra.mxu0 0.0
          %602 = vmatprep.subr.mxu0 0.0
          %603 = vmatpush1.msra.mxu0 0.0
          %604 = vmatprep.subr.mxu0 0.0
          %605 = vmatpush1.msra.mxu0 0.0
          %606 = vmatprep.subr.mxu0 0.0
          %607 = vmatpush1.msra.mxu0 0.0
          %608 = vmatprep.subr.mxu0 0.0
          %609 = vmatpush1.msra.mxu0 0.0
          %610 = vmatprep.subr.mxu0 0.0
          %611 = vmatpush1.msra.mxu0 0.0
          %612 = vmatprep.subr.mxu0 0.0
          %613 = vmatpush1.msra.mxu0 0.0
          %614 = vmatprep.subr.mxu0 0.0
          %615 = vmatpush1.msra.mxu0 0.0
          %616 = vmatprep.subr.mxu0 0.0
          %617 = vmatpush1.msra.mxu0 0.0
          %618 = vmatprep.subr.mxu0 0.0
          %619 = vmatpush1.msra.mxu0 0.0
          %620 = vmatprep.subr.mxu0 0.0
          %621 = vmatpush1.msra.mxu0 0.0
          %622 = vmatprep.subr.mxu0 0.0
          %623 = vmatpush1.msra.mxu0 0.0
          %624 = vmatprep.subr.mxu0 0.0
          %625 = vmatpush1.msra.mxu0 0.0
          %626 = vmatprep.subr.mxu0 0.0
          %627 = vmatpush1.msra.mxu0 0.0
          %628 = vmatprep.subr.mxu0 0.0
          %629 = vmatpush1.msra.mxu0 0.0
          %630 = vmatprep.subr.mxu0 0.0
          %631 = vmatpush1.msra.mxu0 0.0
          %632 = vmatprep.subr.mxu0 0.0
          %633 = vmatpush1.msra.mxu0 0.0
          %634 = vmatprep.subr.mxu0 0.0
          %635 = vmatpush1.msra.mxu0 0.0
          %636 = vmatprep.subr.mxu0 0.0
          %637 = vmatpush1.msra.mxu0 0.0
          %638 = vmatprep.subr.mxu0 0.0
          %639 = vmatpush1.msra.mxu0 0.0
          %640 = vmatprep.subr.mxu0 0.0
          %641 = vmatpush1.msra.mxu0 0.0
          %642 = vmatprep.subr.mxu0 0.0
          %643 = vmatpush1.msra.mxu0 0.0
          %644 = vmatprep.subr.mxu0 0.0
          %645 = vmatpush1.msra.mxu0 0.0
          %646 = vmatprep.mubr.f32.mxu0 0.0
          %647 = vmatmul.mubr.f32.gmra.mrb[0].mxu0 %v580
          %v648 = vpop.f32.mrb[0].mxu0
          %v649 = vadd.f32 0.0, %v648
          %v650 = vpop.f32.mrb[0].mxu0
          %651 = vdwg.mxu0
          %v652 = vld [vmem:[#allocation3] sm:$0xff]
          %v653 = vld [vmem:[#allocation3 + $0x8] sm:$0xff]
          %v654 = vld [vmem:[#allocation3 + $0x10] sm:$0xff]
          %v655 = vld [vmem:[#allocation3 + $0x18] sm:$0xff]
          %v656 = vld [vmem:[#allocation3 + $0x20] sm:$0xff]
          %v657 = vld [vmem:[#allocation3 + $0x28] sm:$0xff]
          %v658 = vld [vmem:[#allocation3 + $0x30] sm:$0xff]
          %v659 = vld [vmem:[#allocation3 + $0x38] sm:$0xff]
          %660 = vmatprep.subr.mxu0 0.0
          %661 = vmatpush1.msra.mxu0 %v652
          %662 = vmatprep.subr.mxu0 0.0
          %663 = vmatpush1.msra.mxu0 %v653
          %664 = vmatprep.subr.mxu0 0.0
          %665 = vmatpush1.msra.mxu0 %v654
          %666 = vmatprep.subr.mxu0 0.0
          %667 = vmatpush1.msra.mxu0 %v655
          %668 = vmatprep.subr.mxu0 0.0
          %669 = vmatpush1.msra.mxu0 %v656
          %670 = vmatprep.subr.mxu0 0.0
          %671 = vmatpush1.msra.mxu0 %v657
          %672 = vmatprep.subr.mxu0 0.0
          %673 = vmatpush1.msra.mxu0 %v658
          %674 = vmatprep.subr.mxu0 0.0
          %675 = vmatpush1.msra.mxu0 %v659
          %676 = vmatprep.subr.mxu0 0.0
          %677 = vmatpush1.msra.mxu0 0.0
          %678 = vmatprep.subr.mxu0 0.0
          %679 = vmatpush1.msra.mxu0 0.0
          %680 = vmatprep.subr.mxu0 0.0
          %681 = vmatpush1.msra.mxu0 0.0
          %682 = vmatprep.subr.mxu0 0.0
          %683 = vmatpush1.msra.mxu0 0.0
          %684 = vmatprep.subr.mxu0 0.0
          %685 = vmatpush1.msra.mxu0 0.0
          %686 = vmatprep.subr.mxu0 0.0
          %687 = vmatpush1.msra.mxu0 0.0
          %688 = vmatprep.subr.mxu0 0.0
          %689 = vmatpush1.msra.mxu0 0.0
          %690 = vmatprep.subr.mxu0 0.0
          %691 = vmatpush1.msra.mxu0 0.0
          %692 = vmatprep.subr.mxu0 0.0
          %693 = vmatpush1.msra.mxu0 0.0
          %694 = vmatprep.subr.mxu0 0.0
          %695 = vmatpush1.msra.mxu0 0.0
          %696 = vmatprep.subr.mxu0 0.0
          %697 = vmatpush1.msra.mxu0 0.0
          %698 = vmatprep.subr.mxu0 0.0
          %699 = vmatpush1.msra.mxu0 0.0
          %700 = vmatprep.subr.mxu0 0.0
          %701 = vmatpush1.msra.mxu0 0.0
          %702 = vmatprep.subr.mxu0 0.0
          %703 = vmatpush1.msra.mxu0 0.0
          %704 = vmatprep.subr.mxu0 0.0
          %705 = vmatpush1.msra.mxu0 0.0
          %706 = vmatprep.subr.mxu0 0.0
          %707 = vmatpush1.msra.mxu0 0.0
          %708 = vmatprep.subr.mxu0 0.0
          %709 = vmatpush1.msra.mxu0 0.0
          %710 = vmatprep.subr.mxu0 0.0
          %711 = vmatpush1.msra.mxu0 0.0
          %712 = vmatprep.subr.mxu0 0.0
          %713 = vmatpush1.msra.mxu0 0.0
          %714 = vmatprep.subr.mxu0 0.0
          %715 = vmatpush1.msra.mxu0 0.0
          %716 = vmatprep.subr.mxu0 0.0
          %717 = vmatpush1.msra.mxu0 0.0
          %718 = vmatprep.subr.mxu0 0.0
          %719 = vmatpush1.msra.mxu0 0.0
          %720 = vmatprep.subr.mxu0 0.0
          %721 = vmatpush1.msra.mxu0 0.0
          %722 = vmatprep.subr.mxu0 0.0
          %723 = vmatpush1.msra.mxu0 0.0
          %724 = vmatprep.mubr.f32.mxu0 0.0
          %725 = vmatmul.mubr.f32.gmra.mrb[0].mxu0 %v580
          %v726 = vpop.f32.mrb[0].mxu0
          %v727 = vadd.f32 0.0, %v726
          %v728 = vpop.f32.mrb[0].mxu0
          %729 = vdwg.mxu0
          %v730 = vrcp.pop 32.0
          %v731 = vmul.f32 %v649, %v730
          %v732 = vmul.f32 %v727, %v730
          %v733 = vmul.f32 %v731, %v731
          %v734 = vsub.f32 %v732, %v733
          %v735 = vmax.f32 %v734, 0.0
          %v736 = vld [vmem:[%s2] sm:$0xf]
          %v737 = vadd.f32 %v735, 1e-05
          %v738 = vrsqrt.pop %v737
          %v739 = vmul.f32 %v736, %v738
          %v740 = vmul.f32 %v731, %v739
          %742 = vrot.lane.b32.xlu0 %v740, 1
          %v743 = vpop.permute.xlu0 %742
          %v745 = vsub.f32 %v736, %v743
          %v746 = vld [vmem:[%s3] sm:$0xff]
          %v747 = vld [vmem:[%s3 + $0x8] sm:$0xff]
          %v748 = vld [vmem:[%s3 + $0x10] sm:$0xff]
          %v749 = vld [vmem:[%s3 + $0x18] sm:$0xff]
          %v750 = vld [vmem:[%s3 + $0x20] sm:$0xff]
          %v751 = vld [vmem:[%s3 + $0x28] sm:$0xff]
          %v752 = vld [vmem:[%s3 + $0x30] sm:$0xff]
          %v753 = vld [vmem:[%s3 + $0x38] sm:$0xff]
          %vm754 = vcmask 31744
          %v756 = vsel %vm754, %v746, 0
          %v759 = vsel %vm754, %v747, 0
          %v762 = vsel %vm754, %v748, 0
          %v765 = vsel %vm754, %v749, 0
          %v768 = vsel %vm754, %v750, 0
          %v771 = vsel %vm754, %v751, 0
          %v774 = vsel %vm754, %v752, 0
          %v777 = vsel %vm754, %v753, 0
          %vm779 = vcmask 1043456
          %v781 = vsel %vm779, %v739, 0
          %783 = vmatprep.subr.mxu0 0.0
          %784 = vmatpush1.msra.mxu0 %v781
          %785 = vmatprep.subr.mxu0 0.0
          %786 = vmatpush1.msra.mxu0 0.0
          %787 = vmatprep.subr.mxu0 0.0
          %788 = vmatpush1.msra.mxu0 0.0
          %789 = vmatprep.subr.mxu0 0.0
          %790 = vmatpush1.msra.mxu0 0.0
          %791 = vmatprep.subr.mxu0 0.0
          %792 = vmatpush1.msra.mxu0 0.0
          %793 = vmatprep.subr.mxu0 0.0
          %794 = vmatpush1.msra.mxu0 0.0
          %795 = vmatprep.subr.mxu0 0.0
          %796 = vmatpush1.msra.mxu0 0.0
          %797 = vmatprep.subr.mxu0 0.0
          %798 = vmatpush1.msra.mxu0 0.0
          %799 = vmatprep.subr.mxu0 0.0
          %800 = vmatpush1.msra.mxu0 0.0
          %801 = vmatprep.subr.mxu0 0.0
          %802 = vmatpush1.msra.mxu0 0.0
          %803 = vmatprep.subr.mxu0 0.0
          %804 = vmatpush1.msra.mxu0 0.0
          %805 = vmatprep.subr.mxu0 0.0
          %806 = vmatpush1.msra.mxu0 0.0
          %807 = vmatprep.subr.mxu0 0.0
          %808 = vmatpush1.msra.mxu0 0.0
          %809 = vmatprep.subr.mxu0 0.0
          %810 = vmatpush1.msra.mxu0 0.0
          %811 = vmatprep.subr.mxu0 0.0
          %812 = vmatpush1.msra.mxu0 0.0
          %813 = vmatprep.subr.mxu0 0.0
          %814 = vmatpush1.msra.mxu0 0.0
          %815 = vmatprep.subr.mxu0 0.0
          %816 = vmatpush1.msra.mxu0 0.0
          %817 = vmatprep.subr.mxu0 0.0
          %818 = vmatpush1.msra.mxu0 0.0
          %819 = vmatprep.subr.mxu0 0.0
          %820 = vmatpush1.msra.mxu0 0.0
          %821 = vmatprep.subr.mxu0 0.0
          %822 = vmatpush1.msra.mxu0 0.0
          %823 = vmatprep.subr.mxu0 0.0
          %824 = vmatpush1.msra.mxu0 0.0
          %825 = vmatprep.subr.mxu0 0.0
          %826 = vmatpush1.msra.mxu0 0.0
          %827 = vmatprep.subr.mxu0 0.0
          %828 = vmatpush1.msra.mxu0 0.0
          %829 = vmatprep.subr.mxu0 0.0
          %830 = vmatpush1.msra.mxu0 0.0
          %831 = vmatprep.subr.mxu0 0.0
          %832 = vmatpush1.msra.mxu0 0.0
          %833 = vmatprep.subr.mxu0 0.0
          %834 = vmatpush1.msra.mxu0 0.0
          %835 = vmatprep.subr.mxu0 0.0
          %836 = vmatpush1.msra.mxu0 0.0
          %837 = vmatprep.subr.mxu0 0.0
          %838 = vmatpush1.msra.mxu0 0.0
          %839 = vmatprep.subr.mxu0 0.0
          %840 = vmatpush1.msra.mxu0 0.0
          %841 = vmatprep.subr.mxu0 0.0
          %842 = vmatpush1.msra.mxu0 0.0
          %843 = vmatprep.subr.mxu0 0.0
          %844 = vmatpush1.msra.mxu0 0.0
          %845 = vmatprep.subr.mxu0 0.0
          %846 = vmatpush1.msra.mxu0 0.0
          %847 = vmatprep.mubr.f32.mxu0 0.0
          %848 = vmatmul.mubr.f32.gmra.mrb[0].mxu0 %v756
          %v849 = vpop.f32.mrb[0].mxu0
          %v850 = vadd.f32 0.0, %v849
          %v851 = vpop.f32.mrb[0].mxu0
          %852 = vmatprep.mubr.f32.mxu0 0.0
          %853 = vmatmul.mubr.f32.gmra.mrb[0].mxu0 %v759
          %v854 = vpop.f32.mrb[0].mxu0
          %v855 = vadd.f32 0.0, %v854
          %v856 = vpop.f32.mrb[0].mxu0
          %857 = vmatprep.mubr.f32.mxu0 0.0
          %858 = vmatmul.mubr.f32.gmra.mrb[0].mxu0 %v762
          %v859 = vpop.f32.mrb[0].mxu0
          %v860 = vadd.f32 0.0, %v859
          %v861 = vpop.f32.mrb[0].mxu0
          %862 = vmatprep.mubr.f32.mxu0 0.0
          %863 = vmatmul.mubr.f32.gmra.mrb[0].mxu0 %v765
          %v864 = vpop.f32.mrb[0].mxu0
          %v865 = vadd.f32 0.0, %v864
          %v866 = vpop.f32.mrb[0].mxu0
          %867 = vmatprep.mubr.f32.mxu0 0.0
          %868 = vmatmul.mubr.f32.gmra.mrb[0].mxu0 %v768
          %v869 = vpop.f32.mrb[0].mxu0
          %v870 = vadd.f32 0.0, %v869
          %v871 = vpop.f32.mrb[0].mxu0
          %872 = vmatprep.mubr.f32.mxu0 0.0
          %873 = vmatmul.mubr.f32.gmra.mrb[0].mxu0 %v771
          %v874 = vpop.f32.mrb[0].mxu0
          %v875 = vadd.f32 0.0, %v874
          %v876 = vpop.f32.mrb[0].mxu0
          %877 = vmatprep.mubr.f32.mxu0 0.0
          %878 = vmatmul.mubr.f32.gmra.mrb[0].mxu0 %v774
          %v879 = vpop.f32.mrb[0].mxu0
          %v880 = vadd.f32 0.0, %v879
          %v881 = vpop.f32.mrb[0].mxu0
          %882 = vmatprep.mubr.f32.mxu0 0.0
          %883 = vmatmul.mubr.f32.gmra.mrb[0].mxu0 %v777
          %v884 = vpop.f32.mrb[0].mxu0
          %v885 = vadd.f32 0.0, %v884
          %v886 = vpop.f32.mrb[0].mxu0
          %887 = vdwg.mxu0
          %888 = vst.msk [vmem:[#allocation2] sm:$0xff] %vm501, %v850
          %889 = vst.msk [vmem:[#allocation2 + $0x8] sm:$0xff] %vm501, %v855
          %890 = vst.msk [vmem:[#allocation2 + $0x10] sm:$0xff] %vm501, %v860
          %891 = vst.msk [vmem:[#allocation2 + $0x18] sm:$0xff] %vm501, %v865
          %892 = vst.msk [vmem:[#allocation2 + $0x20] sm:$0xff] %vm501, %v870
          %893 = vst.msk [vmem:[#allocation2 + $0x28] sm:$0xff] %vm501, %v875
          %894 = vst.msk [vmem:[#allocation2 + $0x30] sm:$0xff] %vm501, %v880
          %895 = vst.msk [vmem:[#allocation2 + $0x38] sm:$0xff] %vm501, %v885
          %v896 = vld [vmem:[%s3] sm:$0xff]
          %v897 = vld [vmem:[%s3 + $0x8] sm:$0xff]
          %v898 = vld [vmem:[%s3 + $0x10] sm:$0xff]
          %v899 = vld [vmem:[%s3 + $0x18] sm:$0xff]
          %v900 = vld [vmem:[%s3 + $0x20] sm:$0xff]
          %v901 = vld [vmem:[%s3 + $0x28] sm:$0xff]
          %v902 = vld [vmem:[%s3 + $0x30] sm:$0xff]
          %v903 = vld [vmem:[%s3 + $0x38] sm:$0xff]
          %905 = vrot.lane.b32.xlu0 %v745, 127
          %v906 = vpop.permute.xlu0 %905
          %v908 = vsel %vm754, %v896, 0
          %v911 = vsel %vm754, %v897, 0
          %v914 = vsel %vm754, %v898, 0
          %v917 = vsel %vm754, %v899, 0
          %v920 = vsel %vm754, %v900, 0
          %v923 = vsel %vm754, %v901, 0
          %v926 = vsel %vm754, %v902, 0
          %v929 = vsel %vm754, %v903, 0
          %v931 = vsel %vm779, %v906, 0
          %933 = vmatprep.subr.mxu0 0.0
          %934 = vmatpush1.msra.mxu0 %v931
          %935 = vmatprep.subr.mxu0 0.0
          %936 = vmatpush1.msra.mxu0 0.0
          %937 = vmatprep.subr.mxu0 0.0
          %938 = vmatpush1.msra.mxu0 0.0
          %939 = vmatprep.subr.mxu0 0.0
          %940 = vmatpush1.msra.mxu0 0.0
          %941 = vmatprep.subr.mxu0 0.0
          %942 = vmatpush1.msra.mxu0 0.0
          %943 = vmatprep.subr.mxu0 0.0
          %944 = vmatpush1.msra.mxu0 0.0
          %945 = vmatprep.subr.mxu0 0.0
          %946 = vmatpush1.msra.mxu0 0.0
          %947 = vmatprep.subr.mxu0 0.0
          %948 = vmatpush1.msra.mxu0 0.0
          %949 = vmatprep.subr.mxu0 0.0
          %950 = vmatpush1.msra.mxu0 0.0
          %951 = vmatprep.subr.mxu0 0.0
          %952 = vmatpush1.msra.mxu0 0.0
          %953 = vmatprep.subr.mxu0 0.0
          %954 = vmatpush1.msra.mxu0 0.0
          %955 = vmatprep.subr.mxu0 0.0
          %956 = vmatpush1.msra.mxu0 0.0
          %957 = vmatprep.subr.mxu0 0.0
          %958 = vmatpush1.msra.mxu0 0.0
          %959 = vmatprep.subr.mxu0 0.0
          %960 = vmatpush1.msra.mxu0 0.0
          %961 = vmatprep.subr.mxu0 0.0
          %962 = vmatpush1.msra.mxu0 0.0
          %963 = vmatprep.subr.mxu0 0.0
          %964 = vmatpush1.msra.mxu0 0.0
          %965 = vmatprep.subr.mxu0 0.0
          %966 = vmatpush1.msra.mxu0 0.0
          %967 = vmatprep.subr.mxu0 0.0
          %968 = vmatpush1.msra.mxu0 0.0
          %969 = vmatprep.subr.mxu0 0.0
          %970 = vmatpush1.msra.mxu0 0.0
          %971 = vmatprep.subr.mxu0 0.0
          %972 = vmatpush1.msra.mxu0 0.0
          %973 = vmatprep.subr.mxu0 0.0
          %974 = vmatpush1.msra.mxu0 0.0
          %975 = vmatprep.subr.mxu0 0.0
          %976 = vmatpush1.msra.mxu0 0.0
          %977 = vmatprep.subr.mxu0 0.0
          %978 = vmatpush1.msra.mxu0 0.0
          %979 = vmatprep.subr.mxu0 0.0
          %980 = vmatpush1.msra.mxu0 0.0
          %981 = vmatprep.subr.mxu0 0.0
          %982 = vmatpush1.msra.mxu0 0.0
          %983 = vmatprep.subr.mxu0 0.0
          %984 = vmatpush1.msra.mxu0 0.0
          %985 = vmatprep.subr.mxu0 0.0
          %986 = vmatpush1.msra.mxu0 0.0
          %987 = vmatprep.subr.mxu0 0.0
          %988 = vmatpush1.msra.mxu0 0.0
          %989 = vmatprep.subr.mxu0 0.0
          %990 = vmatpush1.msra.mxu0 0.0
          %991 = vmatprep.subr.mxu0 0.0
          %992 = vmatpush1.msra.mxu0 0.0
          %993 = vmatprep.subr.mxu0 0.0
          %994 = vmatpush1.msra.mxu0 0.0
          %995 = vmatprep.subr.mxu0 0.0
          %996 = vmatpush1.msra.mxu0 0.0
          %997 = vmatprep.mubr.f32.mxu0 0.0
          %998 = vmatmul.mubr.f32.gmra.mrb[0].mxu0 %v908
          %v999 = vpop.f32.mrb[0].mxu0
          %v1000 = vadd.f32 0.0, %v999
          %v1001 = vpop.f32.mrb[0].mxu0
          %1002 = vmatprep.mubr.f32.mxu0 0.0
          %1003 = vmatmul.mubr.f32.gmra.mrb[0].mxu0 %v911
          %v1004 = vpop.f32.mrb[0].mxu0
          %v1005 = vadd.f32 0.0, %v1004
          %v1006 = vpop.f32.mrb[0].mxu0
          %1007 = vmatprep.mubr.f32.mxu0 0.0
          %1008 = vmatmul.mubr.f32.gmra.mrb[0].mxu0 %v914
          %v1009 = vpop.f32.mrb[0].mxu0
          %v1010 = vadd.f32 0.0, %v1009
          %v1011 = vpop.f32.mrb[0].mxu0
          %1012 = vmatprep.mubr.f32.mxu0 0.0
          %1013 = vmatmul.mubr.f32.gmra.mrb[0].mxu0 %v917
          %v1014 = vpop.f32.mrb[0].mxu0
          %v1015 = vadd.f32 0.0, %v1014
          %v1016 = vpop.f32.mrb[0].mxu0
          %1017 = vmatprep.mubr.f32.mxu0 0.0
          %1018 = vmatmul.mubr.f32.gmra.mrb[0].mxu0 %v920
          %v1019 = vpop.f32.mrb[0].mxu0
          %v1020 = vadd.f32 0.0, %v1019
          %v1021 = vpop.f32.mrb[0].mxu0
          %1022 = vmatprep.mubr.f32.mxu0 0.0
          %1023 = vmatmul.mubr.f32.gmra.mrb[0].mxu0 %v923
          %v1024 = vpop.f32.mrb[0].mxu0
          %v1025 = vadd.f32 0.0, %v1024
          %v1026 = vpop.f32.mrb[0].mxu0
          %1027 = vmatprep.mubr.f32.mxu0 0.0
          %1028 = vmatmul.mubr.f32.gmra.mrb[0].mxu0 %v926
          %v1029 = vpop.f32.mrb[0].mxu0
          %v1030 = vadd.f32 0.0, %v1029
          %v1031 = vpop.f32.mrb[0].mxu0
          %1032 = vmatprep.mubr.f32.mxu0 0.0
          %1033 = vmatmul.mubr.f32.gmra.mrb[0].mxu0 %v929
          %v1034 = vpop.f32.mrb[0].mxu0
          %v1035 = vadd.f32 0.0, %v1034
          %v1036 = vpop.f32.mrb[0].mxu0
          %1037 = vdwg.mxu0
          %1038 = vst.msk [vmem:[#allocation3] sm:$0xff] %vm501, %v1000
          %1039 = vst.msk [vmem:[#allocation3 + $0x8] sm:$0xff] %vm501, %v1005
          %1040 = vst.msk [vmem:[#allocation3 + $0x10] sm:$0xff] %vm501, %v1010
          %1041 = vst.msk [vmem:[#allocation3 + $0x18] sm:$0xff] %vm501, %v1015
          %1042 = vst.msk [vmem:[#allocation3 + $0x20] sm:$0xff] %vm501, %v1020
          %1043 = vst.msk [vmem:[#allocation3 + $0x28] sm:$0xff] %vm501, %v1025
          %1044 = vst.msk [vmem:[#allocation3 + $0x30] sm:$0xff] %vm501, %v1030
          %1045 = vst.msk [vmem:[#allocation3 + $0x38] sm:$0xff] %vm501, %v1035
        $region60: #{tpu_custom_call.1} parent=51 // pred_fallthru
          _
        %1046 = vst.msk [vmem:[%s285] sm:$0xff] %vm468, 0.0
      $region52: #{tpu_custom_call.1} parent=47 // pred_fallthru
        _
      %p1047 = scmp.eq.s32.totalorder %s22, 1
      // Predicated region
      $region61: #{tpu_custom_call.1} parent=47 // pred_check
        %p1048 = pneg %p1047
      $region62: #{tpu_custom_call.1} parent=47 // pred_check_branch
        %1050 = sbr.rel (%p1048) target = $region64
      $region63: #{tpu_custom_call.1} parent=47 // pred_region
        %v1051 = vld [vmem:[#allocation2] sm:$0xff]
        %v1052 = vld [vmem:[#allocation2 + $0x8] sm:$0xff]
        %v1053 = vld [vmem:[#allocation2 + $0x10] sm:$0xff]
        %v1054 = vld [vmem:[#allocation2 + $0x18] sm:$0xff]
        %v1055 = vld [vmem:[#allocation2 + $0x20] sm:$0xff]
        %v1056 = vld [vmem:[#allocation2 + $0x28] sm:$0xff]
        %v1057 = vld [vmem:[#allocation2 + $0x30] sm:$0xff]
        %v1058 = vld [vmem:[#allocation2 + $0x38] sm:$0xff]
        %1060 = vset.pattern.permute.xlu0 0
        %1061 = vperm.xlu0 %1060, %v1051
        %v1062 = vpop.permute.xlu0 %1061
        %1065 = vset.pattern.permute.xlu0 0
        %1066 = vperm.xlu0 %1065, %v1052
        %v1067 = vpop.permute.xlu0 %1066
        %1070 = vset.pattern.permute.xlu0 0
        %1071 = vperm.xlu0 %1070, %v1053
        %v1072 = vpop.permute.xlu0 %1071
        %1075 = vset.pattern.permute.xlu0 0
        %1076 = vperm.xlu0 %1075, %v1054
        %v1077 = vpop.permute.xlu0 %1076
        %1080 = vset.pattern.permute.xlu0 0
        %1081 = vperm.xlu0 %1080, %v1055
        %v1082 = vpop.permute.xlu0 %1081
        %1085 = vset.pattern.permute.xlu0 0
        %1086 = vperm.xlu0 %1085, %v1056
        %v1087 = vpop.permute.xlu0 %1086
        %1090 = vset.pattern.permute.xlu0 0
        %1091 = vperm.xlu0 %1090, %v1057
        %v1092 = vpop.permute.xlu0 %1091
        %1095 = vset.pattern.permute.xlu0 0
        %1096 = vperm.xlu0 %1095, %v1058
        %v1097 = vpop.permute.xlu0 %1096
        %v1099 = vmul.f32 %v397, %v1062
        %v1100 = vmul.f32 %v402, %v1067
        %v1101 = vmul.f32 %v407, %v1072
        %v1102 = vmul.f32 %v412, %v1077
        %v1103 = vmul.f32 %v417, %v1082
        %v1104 = vmul.f32 %v422, %v1087
        %v1105 = vmul.f32 %v427, %v1092
        %v1106 = vmul.f32 %v432, %v1097
        %v1107 = vld [vmem:[#allocation3] sm:$0xff]
        %v1108 = vld [vmem:[#allocation3 + $0x8] sm:$0xff]
        %v1109 = vld [vmem:[#allocation3 + $0x10] sm:$0xff]
        %v1110 = vld [vmem:[#allocation3 + $0x18] sm:$0xff]
        %v1111 = vld [vmem:[#allocation3 + $0x20] sm:$0xff]
        %v1112 = vld [vmem:[#allocation3 + $0x28] sm:$0xff]
        %v1113 = vld [vmem:[#allocation3 + $0x30] sm:$0xff]
        %v1114 = vld [vmem:[#allocation3 + $0x38] sm:$0xff]
        %1116 = vset.pattern.permute.xlu0 0
        %1117 = vperm.xlu0 %1116, %v1107
        %v1118 = vpop.permute.xlu0 %1117
        %1121 = vset.pattern.permute.xlu0 0
        %1122 = vperm.xlu0 %1121, %v1108
        %v1123 = vpop.permute.xlu0 %1122
        %1126 = vset.pattern.permute.xlu0 0
        %1127 = vperm.xlu0 %1126, %v1109
        %v1128 = vpop.permute.xlu0 %1127
        %1131 = vset.pattern.permute.xlu0 0
        %1132 = vperm.xlu0 %1131, %v1110
        %v1133 = vpop.permute.xlu0 %1132
        %1136 = vset.pattern.permute.xlu0 0
        %1137 = vperm.xlu0 %1136, %v1111
        %v1138 = vpop.permute.xlu0 %1137
        %1141 = vset.pattern.permute.xlu0 0
        %1142 = vperm.xlu0 %1141, %v1112
        %v1143 = vpop.permute.xlu0 %1142
        %1146 = vset.pattern.permute.xlu0 0
        %1147 = vperm.xlu0 %1146, %v1113
        %v1148 = vpop.permute.xlu0 %1147
        %1151 = vset.pattern.permute.xlu0 0
        %1152 = vperm.xlu0 %1151, %v1114
        %v1153 = vpop.permute.xlu0 %1152
        %v1155 = vadd.f32 %v1099, %v1118
        %v1156 = vadd.f32 %v1100, %v1123
        %v1157 = vadd.f32 %v1101, %v1128
        %v1158 = vadd.f32 %v1102, %v1133
        %v1159 = vadd.f32 %v1103, %v1138
        %v1160 = vadd.f32 %v1104, %v1143
        %v1161 = vadd.f32 %v1105, %v1148
        %v1162 = vadd.f32 %v1106, %v1153
        %v1163 = vmax.f32 %v1155, 0.0
        %v1164 = vmax.f32 %v1156, 0.0
        %v1165 = vmax.f32 %v1157, 0.0
        %v1166 = vmax.f32 %v1158, 0.0
        %v1167 = vmax.f32 %v1159, 0.0
        %v1168 = vmax.f32 %v1160, 0.0
        %v1169 = vmax.f32 %v1161, 0.0
        %v1170 = vmax.f32 %v1162, 0.0
        %v1171 = vld [vmem:[%s5] sm:$0xff]
        %v1172 = vld [vmem:[%s6] sm:$0xff]
        %1174 = vset.pattern.permute.xlu0 0
        %1175 = vperm.xlu0 %1174, %v1172
        %v1176 = vpop.permute.xlu0 %1175
        %vm1178 = vcmask 523264
        %v1180 = vsel %vm1178, %v1171, 0
        %1182 = vmatprep.subr.mxu0 0.0
        %1183 = vmatpush1.msra.mxu0 %v1163
        %1184 = vmatprep.subr.mxu0 0.0
        %1185 = vmatpush1.msra.mxu0 %v1164
        %1186 = vmatprep.subr.mxu0 0.0
        %1187 = vmatpush1.msra.mxu0 %v1165
        %1188 = vmatprep.subr.mxu0 0.0
        %1189 = vmatpush1.msra.mxu0 %v1166
        %1190 = vmatprep.subr.mxu0 0.0
        %1191 = vmatpush1.msra.mxu0 %v1167
        %1192 = vmatprep.subr.mxu0 0.0
        %1193 = vmatpush1.msra.mxu0 %v1168
        %1194 = vmatprep.subr.mxu0 0.0
        %1195 = vmatpush1.msra.mxu0 %v1169
        %1196 = vmatprep.subr.mxu0 0.0
        %1197 = vmatpush1.msra.mxu0 %v1170
        %1198 = vmatprep.subr.mxu0 0.0
        %1199 = vmatpush1.msra.mxu0 0.0
        %1200 = vmatprep.subr.mxu0 0.0
        %1201 = vmatpush1.msra.mxu0 0.0
        %1202 = vmatprep.subr.mxu0 0.0
        %1203 = vmatpush1.msra.mxu0 0.0
        %1204 = vmatprep.subr.mxu0 0.0
        %1205 = vmatpush1.msra.mxu0 0.0
        %1206 = vmatprep.subr.mxu0 0.0
        %1207 = vmatpush1.msra.mxu0 0.0
        %1208 = vmatprep.subr.mxu0 0.0
        %1209 = vmatpush1.msra.mxu0 0.0
        %1210 = vmatprep.subr.mxu0 0.0
        %1211 = vmatpush1.msra.mxu0 0.0
        %1212 = vmatprep.subr.mxu0 0.0
        %1213 = vmatpush1.msra.mxu0 0.0
        %1214 = vmatprep.subr.mxu0 0.0
        %1215 = vmatpush1.msra.mxu0 0.0
        %1216 = vmatprep.subr.mxu0 0.0
        %1217 = vmatpush1.msra.mxu0 0.0
        %1218 = vmatprep.subr.mxu0 0.0
        %1219 = vmatpush1.msra.mxu0 0.0
        %1220 = vmatprep.subr.mxu0 0.0
        %1221 = vmatpush1.msra.mxu0 0.0
        %1222 = vmatprep.subr.mxu0 0.0
        %1223 = vmatpush1.msra.mxu0 0.0
        %1224 = vmatprep.subr.mxu0 0.0
        %1225 = vmatpush1.msra.mxu0 0.0
        %1226 = vmatprep.subr.mxu0 0.0
        %1227 = vmatpush1.msra.mxu0 0.0
        %1228 = vmatprep.subr.mxu0 0.0
        %1229 = vmatpush1.msra.mxu0 0.0
        %1230 = vmatprep.subr.mxu0 0.0
        %1231 = vmatpush1.msra.mxu0 0.0
        %1232 = vmatprep.subr.mxu0 0.0
        %1233 = vmatpush1.msra.mxu0 0.0
        %1234 = vmatprep.subr.mxu0 0.0
        %1235 = vmatpush1.msra.mxu0 0.0
        %1236 = vmatprep.subr.mxu0 0.0
        %1237 = vmatpush1.msra.mxu0 0.0
        %1238 = vmatprep.subr.mxu0 0.0
        %1239 = vmatpush1.msra.mxu0 0.0
        %1240 = vmatprep.subr.mxu0 0.0
        %1241 = vmatpush1.msra.mxu0 0.0
        %1242 = vmatprep.subr.mxu0 0.0
        %1243 = vmatpush1.msra.mxu0 0.0
        %1244 = vmatprep.subr.mxu0 0.0
        %1245 = vmatpush1.msra.mxu0 0.0
        %1246 = vmatprep.mubr.f32.mxu0 0.0
        %1247 = vmatmul.mubr.f32.gmra.mrb[0].mxu0 %v1180
        %v1248 = vpop.f32.mrb[0].mxu0
        %v1249 = vadd.f32 %v1176, %v1248
        %v1250 = vpop.f32.mrb[0].mxu0
        %1251 = vdwg.mxu0
        %vm1252 = vcmask 15360
        %1253 = vst.msk [vmem:[%s285] sm:$0xff] %vm1252, %v1249
      $region64: #{tpu_custom_call.1} parent=47 // pred_fallthru
        _
      %p1254 = scmp.lt.s32.totalorder %s23, 0
      %s1255 = scalar_select %p1254, %s23, 0
      %s1256 = smul.addr %s1255, 8
      %s1257 = scalar_lea.vmem %s7, %s1256
      // Predicated region
      $region65: #{tpu_custom_call.1} parent=47 // pred_check
        %p1258 = pneg %p200
      $region66: #{tpu_custom_call.1} parent=47 // pred_check_branch
        %1260 = sbr.rel (%p1258) target = $region68
      $region67: #{tpu_custom_call.1} parent=47 // pred_region
        _
      $region68: #{tpu_custom_call.1} parent=47 // pred_fallthru
        _
      // Predicated region
      $region69: #{tpu_custom_call.1} parent=47 // pred_check
        %p1261 = pneg %p200
      $region70: #{tpu_custom_call.1} parent=47 // pred_check_branch
        %1263 = sbr.rel (%p1261) target = $region72
      $region71: #{tpu_custom_call.1} parent=47 // pred_region
        %p1264 = scmp.lt.s32.totalorder %s23, 0
        %s1265 = scalar_select %p1264, %s23, 0
        %s1266 = smul.addr %s1265, 8
        %s1267 = scalar_lea.vmem %s7, %s1266
      $region72: #{tpu_custom_call.1} parent=47 // pred_fallthru
        _
    $region48: #{tpu_custom_call.1} parent=5 // pred_fallthru
      _
    %p1268 = scmp.le.s32.totalorder 2, %s13
    // Predicated region
    $region73: #{tpu_custom_call.1} parent=5 // pred_check
      %p1269 = pneg %p1268
    $region74: #{tpu_custom_call.1} parent=5 // pred_check_branch
      %1271 = sbr.rel (%p1269) target = $region76
    $region75: #{tpu_custom_call.1} parent=5 // pred_region
      %s1272 = ssub.s32 %s13, 2
    $region76: #{tpu_custom_call.1} parent=5 // pred_fallthru
      _
  $region6: #{tpu_custom_call.1} parent=0 // loop_footer
    %s17 = sadd.s32 1, %s13
  $region7: #{tpu_custom_call.1} parent=0 // loop_footer_branch
    %12 = sbr.rel target = $region3
  $region8: #{tpu_custom_call.1} parent=0 // loop_exit
    _

</llo_original>
